<compile_context>
chip_gen: v6e
topology: v6e:2x2x1
jax: 0.10.0
libtpu: 0.0.40
codegen_flags: <defaults>
</compile_context>

<pallas_src>
import functools

import jax
import jax.numpy as jnp
import numpy as np
from jax import lax
from jax.experimental import pallas as pl
from jax.experimental.pallas import tpu as pltpu

_NEG = -1e30  # mask value for padded codebook columns (exp underflows to 0)


def _round_up(x, m):
    return (x + m - 1) // m * m


def _first_argmax(x, col):
    """Index of first maximum along axis=1 (matches jnp/torch first-hit argmax).

    x, col: [R, Kp]; returns [R, 1] int32.  `col` is a hoisted column iota.
    """
    kp = x.shape[1]
    m = jnp.max(x, axis=1, keepdims=True)
    return jnp.min(jnp.where(x == m, col, kp), axis=1, keepdims=True)


def _swav_kernel(z_ref, w_ref, out_ref, *, batch, num_vars, epsilon,
                 sinkhorn_iters, temp, l2_norm, prob_ratio, mxu_bf16):
    B = batch
    K = num_vars

    z = z_ref[...].astype(jnp.float32)          # [2B, Dp]   (both views stacked)
    w = w_ref[...].astype(jnp.float32)          # [Kp, Dp]
    Kp = w.shape[0]

    # trace-time constants (fold divides into multiplies)
    inv_eps = 1.0 / epsilon
    inv_temp = 1.0 / temp
    inv_B = 1.0 / B
    inv_2B = 1.0 / (2 * B)

    if l2_norm:
        # x / max(||x||, 1e-12)  ==  x * rsqrt(max(sum(x^2), 1e-24))   (EUP rsqrt)
        z = z * lax.rsqrt(jnp.maximum(jnp.sum(z * z, axis=1, keepdims=True), 1e-24))

    # single fused codebook matmul for both views; contraction over last dims
    # so W^T is never materialized.
    if mxu_bf16:
        zmm = z.astype(jnp.bfloat16)
        wmm = w.astype(jnp.bfloat16)
    else:
        zmm, wmm = z, w
    logits = lax.dot_general(zmm, wmm,
                             dimension_numbers=(((1,), (1,)), ((), ())),
                             preferred_element_type=jnp.float32)       # [2B, Kp]

    # hoisted iota / masks / ones (JAX does not CSE broadcast_in_dim)
    col2 = lax.broadcasted_iota(jnp.int32, (2 * B, Kp), 1)             # [2B, Kp]
    col1 = col2[:B]                                                    # [B, Kp]
    ones_1B = jnp.ones((1, B), jnp.float32)
    ones_12B = jnp.ones((1, 2 * B), jnp.float32)
    if Kp > K:
        colv2 = col2 < K                                               # [2B, Kp]
        colv1 = colv2[:B]
        colv_row = colv2[:1]                                           # [1, Kp]
        logits = jnp.where(colv2, logits, _NEG)                        # mask pads

    # Sinkhorn target logits (trace-time specialization for prob_ratio == 1.0).
    if prob_ratio == 1.0:
        tw_all = logits                                                # [2B, Kp]
    else:
        lg1 = logits[:B]
        lg2 = logits[B:]
        tw1 = lg1 * prob_ratio + lg2 * (1.0 - prob_ratio)
        tw2 = lg2 * prob_ratio + lg1 * (1.0 - prob_ratio)
        tw_all = jnp.concatenate([tw1, tw2], axis=0)                   # [2B, Kp]

    # ---- Sinkhorn (both views): one shared max shift + one shared exp pass ----
    # Global max subtraction is invariant under the P / sum(P) normalization
    # below (same constant within each view) and prevents exp overflow.
    M = jnp.max(tw_all)
    E_all = jnp.exp((tw_all - M) * inv_eps)                            # pads -> 0

    def sinkhorn(P):                                                   # P: [B, Kp]
        P = P * (1.0 / jnp.sum(P))
        for _ in range(sinkhorn_iters):
            # column (over-batch) sums on the MXU: ones[1,B] @ P -> [1, Kp]
            cs = jnp.dot(ones_1B, P, preferred_element_type=jnp.float32) * K
            if Kp > K:
                cs = jnp.where(colv_row, cs, 1.0)          # guard 0-sum pad cols
            P = P * pl.reciprocal(cs, approx=False)
            rs = jnp.sum(P, axis=1, keepdims=True) * B     # row sums (lanes/XLU)
            P = P * pl.reciprocal(rs, approx=False)
        return P * B

    tp1 = sinkhorn(E_all[:B])
    tp2 = sinkhorn(E_all[B:])

    # temperature scaling + shared-exp softmax / log_softmax over the fused block
    scaled = logits * inv_temp                             # [2B, Kp]
    m = jnp.max(scaled, axis=1, keepdims=True)
    shift = scaled - m
    e = jnp.exp(shift)                                     # one exp pass
    se = jnp.sum(e, axis=1, keepdims=True)
    log_probs = shift - jnp.log(se)                        # log_softmax
    probs = e * pl.reciprocal(se, approx=False)            # softmax

    lp1 = log_probs[:B]
    lp2 = log_probs[B:]

    # soft-target cross entropy: mean over batch of sum over K
    loss_ce = -0.5 * ((jnp.sum(tp1 * lp2) + jnp.sum(tp2 * lp1)) * inv_B)

    # ---- metrics (torch: under no_grad) ----
    k_all = _first_argmax(scaled, col2)                    # [2B, 1]
    k1 = k_all[:B]
    k2 = k_all[B:]

    onehot = (col2 == k_all).astype(jnp.float32)           # [2B, Kp]
    # over-batch means via MXU: ones[1,2B] @ X -> [1, Kp]
    hard_probs = jnp.dot(ones_12B, onehot,
                         preferred_element_type=jnp.float32) * inv_2B
    code_perp = jnp.exp(-jnp.sum(hard_probs * jnp.log(hard_probs + 1e-7)))

    avg_probs = jnp.dot(ones_12B, probs,
                        preferred_element_type=jnp.float32) * inv_2B
    prob_perp = jnp.exp(-jnp.sum(avg_probs * jnp.log(avg_probs + 1e-7)))

    if Kp > K:
        t1 = _first_argmax(jnp.where(colv1, tp1, -1.0), col1)
        t2 = _first_argmax(jnp.where(colv1, tp2, -1.0), col1)
    else:
        t1 = _first_argmax(tp1, col1)
        t2 = _first_argmax(tp2, col1)
    acc_1 = jnp.sum((k1 == t2).astype(jnp.float32)) * inv_B
    acc_2 = jnp.sum((k2 == t1).astype(jnp.float32)) * inv_B
    acc = 0.5 * (acc_1 + acc_2)

    # pack scalars into the (1, 8) output slab using a single hoisted lane iota
    lane = lax.broadcasted_iota(jnp.int32, (1, 8), 1)
    vals = (loss_ce, code_perp, prob_perp, acc, acc_1, acc_2, jnp.float32(B))
    slab = jnp.zeros((1, 8), jnp.float32)
    for i, v in enumerate(vals):
        slab = slab + jnp.where(lane == i, v.astype(jnp.float32), 0.0)
    out_ref[...] = slab


def swav_vq_dis_forward(z1, z2, w, *, epsilon=0.05, sinkhorn_iters=3, temp=0.1,
                        l2_norm=True, prob_ratio=1.0, mxu_bf16=True):
    B, D = z1.shape
    K, Dw = w.shape
    assert z2.shape == (B, D) and Dw == D

    # lane-dense padding: num_vars (logits lane dim) and dim to multiples of 128.
    # Padded codebook rows/cols are zero; padded columns are masked in-kernel.
    # (Batch ideally a multiple of 8 for sublane density; correctness holds regardless.)
    Dp = _round_up(D, 128)
    Kp = _round_up(K, 128)

    z_all = jnp.concatenate([z1, z2], axis=0)              # [2B, D]
    if Dp > D:
        z_all = jnp.pad(z_all, ((0, 0), (0, Dp - D)))
    wp = w
    if Kp > K or Dp > D:
        wp = jnp.pad(wp, ((0, Kp - K), (0, Dp - D)))

    kernel = functools.partial(
        _swav_kernel, batch=int(B), num_vars=int(K), epsilon=float(epsilon),
        sinkhorn_iters=int(sinkhorn_iters), temp=float(temp),
        l2_norm=bool(l2_norm), prob_ratio=float(prob_ratio),
        mxu_bf16=bool(mxu_bf16))

    # rough live-set estimate: inputs + ~10 live [2B, Kp] f32 temporaries
    est = 4 * (2 * B * Dp + Kp * Dp + 10 * 2 * B * Kp) + (1 << 20)
    vmem_limit = int(min(96 * 1024 * 1024, max(32 * 1024 * 1024, 2 * est)))

    out = pl.pallas_call(
        kernel,
        out_shape=jax.ShapeDtypeStruct((1, 8), jnp.float32),
        in_specs=[pl.BlockSpec(memory_space=pltpu.MemorySpace.VMEM),
                  pl.BlockSpec(memory_space=pltpu.MemorySpace.VMEM)],
        out_specs=pl.BlockSpec(memory_space=pltpu.MemorySpace.VMEM),
        compiler_params=pltpu.CompilerParams(vmem_limit_bytes=vmem_limit),
    )(z_all, wp)

    result = {
        'loss_ce': out[0, 0],
        'loss': out[0, 0],
        'code_perplexity': out[0, 1],
        'prob_perplexity': out[0, 2],
        'acc': out[0, 3],
        'acc_1': out[0, 4],
        'acc_2': out[0, 5],
        'batch_size': out[0, 6],
    }
    return result, out


def _reference(z1, z2, w, *, epsilon=0.05, sinkhorn_iters=3, temp=0.1,
               l2_norm=True, prob_ratio=1.0, mxu_bf16=False):
    """Pure-JAX mirror of the PyTorch forward (single-device, soft targets)."""
    z1 = z1.astype(jnp.float32)
    z2 = z2.astype(jnp.float32)
    w = w.astype(jnp.float32)
    B, _ = z1.shape
    K = w.shape[0]
    if l2_norm:
        z1 = z1 / jnp.maximum(jnp.linalg.norm(z1, axis=1, keepdims=True), 1e-12)
        z2 = z2 / jnp.maximum(jnp.linalg.norm(z2, axis=1, keepdims=True), 1e-12)
    if mxu_bf16:
        def mm(a, b):
            return jnp.dot(a.astype(jnp.bfloat16), b.astype(jnp.bfloat16).T,
                           preferred_element_type=jnp.float32)
    else:
        def mm(a, b):
            return jnp.dot(a, b.T)
    l1 = mm(z1, w)
    l2 = mm(z2, w)
    tw1 = l1 * prob_ratio + l2 * (1 - prob_ratio)
    tw2 = l2 * prob_ratio + l1 * (1 - prob_ratio)

    def sinkhorn(out):
        Q = jnp.exp(out / epsilon).T
        Q = Q / jnp.sum(Q)
        for _ in range(sinkhorn_iters):
            Q = Q / (jnp.sum(Q, axis=1, keepdims=True) * K)
            Q = Q / (jnp.sum(Q, axis=0, keepdims=True) * B)
        return (Q * B).T

    tp1 = sinkhorn(tw1)
    tp2 = sinkhorn(tw2)
    l1 = l1 / temp
    l2 = l2 / temp
    lp1 = jax.nn.log_softmax(l1, axis=1)
    lp2 = jax.nn.log_softmax(l2, axis=1)
    loss_ce = -0.5 * (jnp.mean(jnp.sum(tp1 * lp2, axis=1)) +
                      jnp.mean(jnp.sum(tp2 * lp1, axis=1)))
    logits = jnp.concatenate([l1, l2], axis=0)
    k = jnp.argmax(logits, axis=-1)
    hard_probs = jnp.mean(jax.nn.one_hot(k, K), axis=0)
    code_perp = jnp.exp(-jnp.sum(hard_probs * jnp.log(hard_probs + 1e-7)))
    avg_probs = jnp.mean(jax.nn.softmax(logits, axis=-1), axis=0)
    prob_perp = jnp.exp(-jnp.sum(avg_probs * jnp.log(avg_probs + 1e-7)))
    acc_1 = jnp.mean((jnp.argmax(l1, 1) == jnp.argmax(tp2, 1)).astype(jnp.float32))
    acc_2 = jnp.mean((jnp.argmax(l2, 1) == jnp.argmax(tp1, 1)).astype(jnp.float32))
    return jnp.stack([loss_ce, code_perp, prob_perp, 0.5 * (acc_1 + acc_2),
                      acc_1, acc_2, jnp.float32(B), 0.0]).reshape(1, 8)


if __name__ == "__main__":
    # small shapes: batch=8, dim=32, num_vars(codebook)=16
    B, DIM, NUM_VARS = 8, 32, 16
    key = jax.random.PRNGKey(0)
    k1, k2, k3 = jax.random.split(key, 3)
    z_1 = jax.random.normal(k1, (B, DIM), dtype=jnp.float32)
    z_2 = jax.random.normal(k2, (B, DIM), dtype=jnp.float32)
    # deterministic codebook weight, roughly nn.Linear scale: [num_vars, dim]
    codebook_w = jax.random.normal(k3, (NUM_VARS, DIM), dtype=jnp.float32) / jnp.sqrt(DIM)

    # 1) exact-f32 MXU path: parity with the PyTorch forward semantics
    _, raw_f32 = swav_vq_dis_forward(z_1, z_2, codebook_w, mxu_bf16=False)
    raw_f32 = jax.block_until_ready(raw_f32)
    ref_f32 = np.asarray(_reference(z_1, z_2, codebook_w, mxu_bf16=False))
    np.testing.assert_allclose(np.asarray(raw_f32), ref_f32, rtol=2e-3, atol=2e-3)

    # 2) default bf16-MXU path (f32 accumulation), checked against a reference
    #    that uses the same bf16 operand precision
    result, raw_bf16 = swav_vq_dis_forward(z_1, z_2, codebook_w)
    raw_bf16 = jax.block_until_ready(raw_bf16)
    ref_bf16 = np.asarray(_reference(z_1, z_2, codebook_w, mxu_bf16=True))
    np.testing.assert_allclose(np.asarray(raw_bf16), ref_bf16, rtol=5e-3, atol=5e-3)

    print("KERNEL_OK")
</pallas_src>

<mosaic_0001>
module attributes {stable_mosaic.version = 11 : i64} {
  func.func @_swav_kernel(%arg0: memref<16x128xf32, #tpu.memory_space<vmem>>, %arg1: memref<128x128xf32, #tpu.memory_space<vmem>>, %arg2: memref<1x8xf32, #tpu.memory_space<vmem>>) attributes {dimension_semantics = [], scalar_prefetch = 0 : i64, scratch_operands = 0 : i64, tpu.core_type = #tpu.core_type<tc>} {
    %c0 = arith.constant 0 : index
    %c0_0 = arith.constant 0 : index
    %0 = vector.load %arg0[%c0, %c0_0] : memref<16x128xf32, #tpu.memory_space<vmem>>, vector<16x128xf32>
    %c0_1 = arith.constant 0 : index
    %c0_2 = arith.constant 0 : index
    %1 = vector.load %arg1[%c0_1, %c0_2] : memref<128x128xf32, #tpu.memory_space<vmem>>, vector<128x128xf32>
    %2 = arith.mulf %0, %0 : vector<16x128xf32>
    %cst = arith.constant dense<0.000000e+00> : vector<16xf32>
    %3 = vector.multi_reduction <add>, %2, %cst [1] : vector<16x128xf32> to vector<16xf32>
    %4 = vector.shape_cast %3 : vector<16xf32> to vector<16x1xf32>
    %cst_3 = arith.constant 1.000000e-24 : f32
    %5 = vector.broadcast %cst_3 : f32 to vector<16x1xf32>
    %6 = arith.maximumf %4, %5 : vector<16x1xf32>
    %7 = math.rsqrt %6 : vector<16x1xf32>
    %8 = vector.broadcast %7 : vector<16x1xf32> to vector<16x128xf32>
    %9 = arith.mulf %0, %8 : vector<16x128xf32>
    %cst_4 = arith.constant dense<0.000000e+00> : vector<16x128xf32>
    %10 = tpu.matmul %9, %1, %cst_4 {dimension_numbers = #tpu.dot_dimension_numbers<[1], [1], [0], [0], [0, 0, 1, 0], [], []>} : vector<16x128xf32>, vector<128x128xf32>, vector<16x128xf32> -> vector<16x128xf32>
    %11 = tpu.iota {dimensions = array<i32: 1>} : vector<16x128xi32>
    %12 = vector.extract_strided_slice %11 {offsets = [0, 0], sizes = [8, 128], strides = [1, 1]} : vector<16x128xi32> to vector<8x128xi32>
    %cst_5 = arith.constant 1.000000e+00 : f32
    %13 = vector.broadcast %cst_5 : f32 to vector<1x8xf32>
    %cst_6 = arith.constant 1.000000e+00 : f32
    %14 = vector.broadcast %cst_6 : f32 to vector<1x16xf32>
    %c16_i32 = arith.constant 16 : i32
    %15 = vector.broadcast %c16_i32 : i32 to vector<16x128xi32>
    %16 = arith.cmpi slt, %11, %15 : vector<16x128xi32>
    %17 = vector.extract_strided_slice %16 {offsets = [0, 0], sizes = [8, 128], strides = [1, 1]} : vector<16x128xi1> to vector<8x128xi1>
    %18 = vector.extract_strided_slice %16 {offsets = [0, 0], sizes = [1, 128], strides = [1, 1]} : vector<16x128xi1> to vector<1x128xi1>
    %cst_7 = arith.constant -1.000000e+30 : f32
    %19 = vector.broadcast %cst_7 : f32 to vector<16x128xf32>
    %20 = arith.select %16, %10, %19 : vector<16x128xi1>, vector<16x128xf32>
    %21 = vector.shape_cast %20 : vector<16x128xf32> to vector<1x16x128xf32>
    %cst_8 = arith.constant dense<0xFF800000> : vector<1xf32>
    %22 = vector.multi_reduction <maximumf>, %21, %cst_8 [1, 2] : vector<1x16x128xf32> to vector<1xf32>
    %23 = vector.shape_cast %22 : vector<1xf32> to vector<1x1x1xf32>
    %24 = vector.extract %23[0, 0, 0] : f32 from vector<1x1x1xf32>
    %25 = vector.broadcast %24 : f32 to vector<16x128xf32>
    %26 = arith.subf %20, %25 : vector<16x128xf32>
    %cst_9 = arith.constant 2.000000e+01 : f32
    %27 = vector.broadcast %cst_9 : f32 to vector<16x128xf32>
    %28 = arith.mulf %26, %27 : vector<16x128xf32>
    %29 = math.exp %28 : vector<16x128xf32>
    %30 = vector.extract_strided_slice %29 {offsets = [0, 0], sizes = [8, 128], strides = [1, 1]} : vector<16x128xf32> to vector<8x128xf32>
    %31 = vector.shape_cast %30 : vector<8x128xf32> to vector<1x8x128xf32>
    %cst_10 = arith.constant dense<0.000000e+00> : vector<1xf32>
    %32 = vector.multi_reduction <add>, %31, %cst_10 [1, 2] : vector<1x8x128xf32> to vector<1xf32>
    %33 = vector.shape_cast %32 : vector<1xf32> to vector<1x1x1xf32>
    %34 = vector.extract %33[0, 0, 0] : f32 from vector<1x1x1xf32>
    %cst_11 = arith.constant 1.000000e+00 : f32
    %35 = arith.divf %cst_11, %34 : f32
    %36 = vector.broadcast %35 : f32 to vector<8x128xf32>
    %37 = arith.mulf %30, %36 : vector<8x128xf32>
    %cst_12 = arith.constant dense<0.000000e+00> : vector<1x128xf32>
    %38 = tpu.matmul %13, %37, %cst_12 {dimension_numbers = #tpu.dot_dimension_numbers<[1], [0], [0], [1], [0, 0, 1, 1], [], []>} : vector<1x8xf32>, vector<8x128xf32>, vector<1x128xf32> -> vector<1x128xf32>
    %cst_13 = arith.constant 1.600000e+01 : f32
    %39 = vector.broadcast %cst_13 : f32 to vector<1x128xf32>
    %40 = arith.mulf %38, %39 : vector<1x128xf32>
    %cst_14 = arith.constant 1.000000e+00 : f32
    %41 = vector.broadcast %cst_14 : f32 to vector<1x128xf32>
    %42 = arith.select %18, %40, %41 : vector<1x128xi1>, vector<1x128xf32>
    %43 = tpu.reciprocal %42 : vector<1x128xf32> -> vector<1x128xf32>
    %44 = vector.broadcast %43 : vector<1x128xf32> to vector<8x128xf32>
    %45 = arith.mulf %37, %44 : vector<8x128xf32>
    %cst_15 = arith.constant dense<0.000000e+00> : vector<8xf32>
    %46 = vector.multi_reduction <add>, %45, %cst_15 [1] : vector<8x128xf32> to vector<8xf32>
    %47 = vector.shape_cast %46 : vector<8xf32> to vector<8x1xf32>
    %cst_16 = arith.constant 8.000000e+00 : f32
    %48 = vector.broadcast %cst_16 : f32 to vector<8x1xf32>
    %49 = arith.mulf %47, %48 : vector<8x1xf32>
    %50 = tpu.reciprocal %49 : vector<8x1xf32> -> vector<8x1xf32>
    %51 = vector.broadcast %50 : vector<8x1xf32> to vector<8x128xf32>
    %52 = arith.mulf %45, %51 : vector<8x128xf32>
    %cst_17 = arith.constant dense<0.000000e+00> : vector<1x128xf32>
    %53 = tpu.matmul %13, %52, %cst_17 {dimension_numbers = #tpu.dot_dimension_numbers<[1], [0], [0], [1], [0, 0, 1, 1], [], []>} : vector<1x8xf32>, vector<8x128xf32>, vector<1x128xf32> -> vector<1x128xf32>
    %cst_18 = arith.constant 1.600000e+01 : f32
    %54 = vector.broadcast %cst_18 : f32 to vector<1x128xf32>
    %55 = arith.mulf %53, %54 : vector<1x128xf32>
    %cst_19 = arith.constant 1.000000e+00 : f32
    %56 = vector.broadcast %cst_19 : f32 to vector<1x128xf32>
    %57 = arith.select %18, %55, %56 : vector<1x128xi1>, vector<1x128xf32>
    %58 = tpu.reciprocal %57 : vector<1x128xf32> -> vector<1x128xf32>
    %59 = vector.broadcast %58 : vector<1x128xf32> to vector<8x128xf32>
    %60 = arith.mulf %52, %59 : vector<8x128xf32>
    %cst_20 = arith.constant dense<0.000000e+00> : vector<8xf32>
    %61 = vector.multi_reduction <add>, %60, %cst_20 [1] : vector<8x128xf32> to vector<8xf32>
    %62 = vector.shape_cast %61 : vector<8xf32> to vector<8x1xf32>
    %cst_21 = arith.constant 8.000000e+00 : f32
    %63 = vector.broadcast %cst_21 : f32 to vector<8x1xf32>
    %64 = arith.mulf %62, %63 : vector<8x1xf32>
    %65 = tpu.reciprocal %64 : vector<8x1xf32> -> vector<8x1xf32>
    %66 = vector.broadcast %65 : vector<8x1xf32> to vector<8x128xf32>
    %67 = arith.mulf %60, %66 : vector<8x128xf32>
    %cst_22 = arith.constant dense<0.000000e+00> : vector<1x128xf32>
    %68 = tpu.matmul %13, %67, %cst_22 {dimension_numbers = #tpu.dot_dimension_numbers<[1], [0], [0], [1], [0, 0, 1, 1], [], []>} : vector<1x8xf32>, vector<8x128xf32>, vector<1x128xf32> -> vector<1x128xf32>
    %cst_23 = arith.constant 1.600000e+01 : f32
    %69 = vector.broadcast %cst_23 : f32 to vector<1x128xf32>
    %70 = arith.mulf %68, %69 : vector<1x128xf32>
    %cst_24 = arith.constant 1.000000e+00 : f32
    %71 = vector.broadcast %cst_24 : f32 to vector<1x128xf32>
    %72 = arith.select %18, %70, %71 : vector<1x128xi1>, vector<1x128xf32>
    %73 = tpu.reciprocal %72 : vector<1x128xf32> -> vector<1x128xf32>
    %74 = vector.broadcast %73 : vector<1x128xf32> to vector<8x128xf32>
    %75 = arith.mulf %67, %74 : vector<8x128xf32>
    %cst_25 = arith.constant dense<0.000000e+00> : vector<8xf32>
    %76 = vector.multi_reduction <add>, %75, %cst_25 [1] : vector<8x128xf32> to vector<8xf32>
    %77 = vector.shape_cast %76 : vector<8xf32> to vector<8x1xf32>
    %cst_26 = arith.constant 8.000000e+00 : f32
    %78 = vector.broadcast %cst_26 : f32 to vector<8x1xf32>
    %79 = arith.mulf %77, %78 : vector<8x1xf32>
    %80 = tpu.reciprocal %79 : vector<8x1xf32> -> vector<8x1xf32>
    %81 = vector.broadcast %80 : vector<8x1xf32> to vector<8x128xf32>
    %82 = arith.mulf %75, %81 : vector<8x128xf32>
    %cst_27 = arith.constant 8.000000e+00 : f32
    %83 = vector.broadcast %cst_27 : f32 to vector<8x128xf32>
    %84 = arith.mulf %82, %83 : vector<8x128xf32>
    %85 = vector.extract_strided_slice %29 {offsets = [8, 0], sizes = [8, 128], strides = [1, 1]} : vector<16x128xf32> to vector<8x128xf32>
    %86 = vector.shape_cast %85 : vector<8x128xf32> to vector<1x8x128xf32>
    %cst_28 = arith.constant dense<0.000000e+00> : vector<1xf32>
    %87 = vector.multi_reduction <add>, %86, %cst_28 [1, 2] : vector<1x8x128xf32> to vector<1xf32>
    %88 = vector.shape_cast %87 : vector<1xf32> to vector<1x1x1xf32>
    %89 = vector.extract %88[0, 0, 0] : f32 from vector<1x1x1xf32>
    %cst_29 = arith.constant 1.000000e+00 : f32
    %90 = arith.divf %cst_29, %89 : f32
    %91 = vector.broadcast %90 : f32 to vector<8x128xf32>
    %92 = arith.mulf %85, %91 : vector<8x128xf32>
    %cst_30 = arith.constant dense<0.000000e+00> : vector<1x128xf32>
    %93 = tpu.matmul %13, %92, %cst_30 {dimension_numbers = #tpu.dot_dimension_numbers<[1], [0], [0], [1], [0, 0, 1, 1], [], []>} : vector<1x8xf32>, vector<8x128xf32>, vector<1x128xf32> -> vector<1x128xf32>
    %cst_31 = arith.constant 1.600000e+01 : f32
    %94 = vector.broadcast %cst_31 : f32 to vector<1x128xf32>
    %95 = arith.mulf %93, %94 : vector<1x128xf32>
    %cst_32 = arith.constant 1.000000e+00 : f32
    %96 = vector.broadcast %cst_32 : f32 to vector<1x128xf32>
    %97 = arith.select %18, %95, %96 : vector<1x128xi1>, vector<1x128xf32>
    %98 = tpu.reciprocal %97 : vector<1x128xf32> -> vector<1x128xf32>
    %99 = vector.broadcast %98 : vector<1x128xf32> to vector<8x128xf32>
    %100 = arith.mulf %92, %99 : vector<8x128xf32>
    %cst_33 = arith.constant dense<0.000000e+00> : vector<8xf32>
    %101 = vector.multi_reduction <add>, %100, %cst_33 [1] : vector<8x128xf32> to vector<8xf32>
    %102 = vector.shape_cast %101 : vector<8xf32> to vector<8x1xf32>
    %cst_34 = arith.constant 8.000000e+00 : f32
    %103 = vector.broadcast %cst_34 : f32 to vector<8x1xf32>
    %104 = arith.mulf %102, %103 : vector<8x1xf32>
    %105 = tpu.reciprocal %104 : vector<8x1xf32> -> vector<8x1xf32>
    %106 = vector.broadcast %105 : vector<8x1xf32> to vector<8x128xf32>
    %107 = arith.mulf %100, %106 : vector<8x128xf32>
    %cst_35 = arith.constant dense<0.000000e+00> : vector<1x128xf32>
    %108 = tpu.matmul %13, %107, %cst_35 {dimension_numbers = #tpu.dot_dimension_numbers<[1], [0], [0], [1], [0, 0, 1, 1], [], []>} : vector<1x8xf32>, vector<8x128xf32>, vector<1x128xf32> -> vector<1x128xf32>
    %cst_36 = arith.constant 1.600000e+01 : f32
    %109 = vector.broadcast %cst_36 : f32 to vector<1x128xf32>
    %110 = arith.mulf %108, %109 : vector<1x128xf32>
    %cst_37 = arith.constant 1.000000e+00 : f32
    %111 = vector.broadcast %cst_37 : f32 to vector<1x128xf32>
    %112 = arith.select %18, %110, %111 : vector<1x128xi1>, vector<1x128xf32>
    %113 = tpu.reciprocal %112 : vector<1x128xf32> -> vector<1x128xf32>
    %114 = vector.broadcast %113 : vector<1x128xf32> to vector<8x128xf32>
    %115 = arith.mulf %107, %114 : vector<8x128xf32>
    %cst_38 = arith.constant dense<0.000000e+00> : vector<8xf32>
    %116 = vector.multi_reduction <add>, %115, %cst_38 [1] : vector<8x128xf32> to vector<8xf32>
    %117 = vector.shape_cast %116 : vector<8xf32> to vector<8x1xf32>
    %cst_39 = arith.constant 8.000000e+00 : f32
    %118 = vector.broadcast %cst_39 : f32 to vector<8x1xf32>
    %119 = arith.mulf %117, %118 : vector<8x1xf32>
    %120 = tpu.reciprocal %119 : vector<8x1xf32> -> vector<8x1xf32>
    %121 = vector.broadcast %120 : vector<8x1xf32> to vector<8x128xf32>
    %122 = arith.mulf %115, %121 : vector<8x128xf32>
    %cst_40 = arith.constant dense<0.000000e+00> : vector<1x128xf32>
    %123 = tpu.matmul %13, %122, %cst_40 {dimension_numbers = #tpu.dot_dimension_numbers<[1], [0], [0], [1], [0, 0, 1, 1], [], []>} : vector<1x8xf32>, vector<8x128xf32>, vector<1x128xf32> -> vector<1x128xf32>
    %cst_41 = arith.constant 1.600000e+01 : f32
    %124 = vector.broadcast %cst_41 : f32 to vector<1x128xf32>
    %125 = arith.mulf %123, %124 : vector<1x128xf32>
    %cst_42 = arith.constant 1.000000e+00 : f32
    %126 = vector.broadcast %cst_42 : f32 to vector<1x128xf32>
    %127 = arith.select %18, %125, %126 : vector<1x128xi1>, vector<1x128xf32>
    %128 = tpu.reciprocal %127 : vector<1x128xf32> -> vector<1x128xf32>
    %129 = vector.broadcast %128 : vector<1x128xf32> to vector<8x128xf32>
    %130 = arith.mulf %122, %129 : vector<8x128xf32>
    %cst_43 = arith.constant dense<0.000000e+00> : vector<8xf32>
    %131 = vector.multi_reduction <add>, %130, %cst_43 [1] : vector<8x128xf32> to vector<8xf32>
    %132 = vector.shape_cast %131 : vector<8xf32> to vector<8x1xf32>
    %cst_44 = arith.constant 8.000000e+00 : f32
    %133 = vector.broadcast %cst_44 : f32 to vector<8x1xf32>
    %134 = arith.mulf %132, %133 : vector<8x1xf32>
    %135 = tpu.reciprocal %134 : vector<8x1xf32> -> vector<8x1xf32>
    %136 = vector.broadcast %135 : vector<8x1xf32> to vector<8x128xf32>
    %137 = arith.mulf %130, %136 : vector<8x128xf32>
    %cst_45 = arith.constant 8.000000e+00 : f32
    %138 = vector.broadcast %cst_45 : f32 to vector<8x128xf32>
    %139 = arith.mulf %137, %138 : vector<8x128xf32>
    %cst_46 = arith.constant 1.000000e+01 : f32
    %140 = vector.broadcast %cst_46 : f32 to vector<16x128xf32>
    %141 = arith.mulf %20, %140 : vector<16x128xf32>
    %cst_47 = arith.constant dense<0xFF800000> : vector<16xf32>
    %142 = vector.multi_reduction <maximumf>, %141, %cst_47 [1] : vector<16x128xf32> to vector<16xf32>
    %143 = vector.shape_cast %142 : vector<16xf32> to vector<16x1xf32>
    %144 = vector.broadcast %143 : vector<16x1xf32> to vector<16x128xf32>
    %145 = arith.subf %141, %144 : vector<16x128xf32>
    %146 = math.exp %145 : vector<16x128xf32>
    %cst_48 = arith.constant dense<0.000000e+00> : vector<16xf32>
    %147 = vector.multi_reduction <add>, %146, %cst_48 [1] : vector<16x128xf32> to vector<16xf32>
    %148 = vector.shape_cast %147 : vector<16xf32> to vector<16x1xf32>
    %149 = math.log %148 : vector<16x1xf32>
    %150 = vector.broadcast %149 : vector<16x1xf32> to vector<16x128xf32>
    %151 = arith.subf %145, %150 : vector<16x128xf32>
    %152 = tpu.reciprocal %148 : vector<16x1xf32> -> vector<16x1xf32>
    %153 = vector.broadcast %152 : vector<16x1xf32> to vector<16x128xf32>
    %154 = arith.mulf %146, %153 : vector<16x128xf32>
    %155 = vector.extract_strided_slice %151 {offsets = [0, 0], sizes = [8, 128], strides = [1, 1]} : vector<16x128xf32> to vector<8x128xf32>
    %156 = vector.extract_strided_slice %151 {offsets = [8, 0], sizes = [8, 128], strides = [1, 1]} : vector<16x128xf32> to vector<8x128xf32>
    %157 = arith.mulf %84, %156 : vector<8x128xf32>
    %158 = vector.shape_cast %157 : vector<8x128xf32> to vector<1x8x128xf32>
    %cst_49 = arith.constant dense<0.000000e+00> : vector<1xf32>
    %159 = vector.multi_reduction <add>, %158, %cst_49 [1, 2] : vector<1x8x128xf32> to vector<1xf32>
    %160 = vector.shape_cast %159 : vector<1xf32> to vector<1x1x1xf32>
    %161 = vector.extract %160[0, 0, 0] : f32 from vector<1x1x1xf32>
    %162 = arith.mulf %139, %155 : vector<8x128xf32>
    %163 = vector.shape_cast %162 : vector<8x128xf32> to vector<1x8x128xf32>
    %cst_50 = arith.constant dense<0.000000e+00> : vector<1xf32>
    %164 = vector.multi_reduction <add>, %163, %cst_50 [1, 2] : vector<1x8x128xf32> to vector<1xf32>
    %165 = vector.shape_cast %164 : vector<1xf32> to vector<1x1x1xf32>
    %166 = vector.extract %165[0, 0, 0] : f32 from vector<1x1x1xf32>
    %167 = arith.addf %161, %166 : f32
    %cst_51 = arith.constant 1.250000e-01 : f32
    %168 = arith.mulf %167, %cst_51 : f32
    %cst_52 = arith.constant -5.000000e-01 : f32
    %169 = arith.mulf %cst_52, %168 : f32
    %cst_53 = arith.constant dense<0xFF800000> : vector<16xf32>
    %170 = vector.multi_reduction <maximumf>, %141, %cst_53 [1] : vector<16x128xf32> to vector<16xf32>
    %171 = vector.shape_cast %170 : vector<16xf32> to vector<16x1xf32>
    %172 = vector.broadcast %171 : vector<16x1xf32> to vector<16x128xf32>
    %173 = arith.cmpf oeq, %141, %172 : vector<16x128xf32>
    %c128_i32 = arith.constant 128 : i32
    %174 = vector.broadcast %c128_i32 : i32 to vector<16x128xi32>
    %175 = arith.select %173, %11, %174 : vector<16x128xi1>, vector<16x128xi32>
    %cst_54 = arith.constant dense<2147483647> : vector<16xi32>
    %176 = vector.multi_reduction <minsi>, %175, %cst_54 [1] : vector<16x128xi32> to vector<16xi32>
    %177 = vector.shape_cast %176 : vector<16xi32> to vector<16x1xi32>
    %178 = vector.extract_strided_slice %177 {offsets = [0, 0], sizes = [8, 1], strides = [1, 1]} : vector<16x1xi32> to vector<8x1xi32>
    %179 = vector.extract_strided_slice %177 {offsets = [8, 0], sizes = [8, 1], strides = [1, 1]} : vector<16x1xi32> to vector<8x1xi32>
    %180 = vector.broadcast %177 : vector<16x1xi32> to vector<16x128xi32>
    %181 = arith.cmpi eq, %11, %180 : vector<16x128xi32>
    %182 = arith.extui %181 : vector<16x128xi1> to vector<16x128xi32>
    %183 = arith.sitofp %182 : vector<16x128xi32> to vector<16x128xf32>
    %cst_55 = arith.constant dense<0.000000e+00> : vector<1x128xf32>
    %184 = tpu.matmul %14, %183, %cst_55 {dimension_numbers = #tpu.dot_dimension_numbers<[1], [0], [0], [1], [0, 0, 1, 1], [], []>} : vector<1x16xf32>, vector<16x128xf32>, vector<1x128xf32> -> vector<1x128xf32>
    %cst_56 = arith.constant 6.250000e-02 : f32
    %185 = vector.broadcast %cst_56 : f32 to vector<1x128xf32>
    %186 = arith.mulf %184, %185 : vector<1x128xf32>
    %cst_57 = arith.constant 1.000000e-07 : f32
    %187 = vector.broadcast %cst_57 : f32 to vector<1x128xf32>
    %188 = arith.addf %186, %187 : vector<1x128xf32>
    %189 = math.log %188 : vector<1x128xf32>
    %190 = arith.mulf %186, %189 : vector<1x128xf32>
    %191 = vector.shape_cast %190 : vector<1x128xf32> to vector<1x1x128xf32>
    %cst_58 = arith.constant dense<0.000000e+00> : vector<1xf32>
    %192 = vector.multi_reduction <add>, %191, %cst_58 [1, 2] : vector<1x1x128xf32> to vector<1xf32>
    %193 = vector.shape_cast %192 : vector<1xf32> to vector<1x1x1xf32>
    %194 = vector.extract %193[0, 0, 0] : f32 from vector<1x1x1xf32>
    %cst_59 = arith.constant 0.000000e+00 : f32
    %195 = arith.subf %cst_59, %194 : f32
    %196 = math.exp %195 : f32
    %cst_60 = arith.constant dense<0.000000e+00> : vector<1x128xf32>
    %197 = tpu.matmul %14, %154, %cst_60 {dimension_numbers = #tpu.dot_dimension_numbers<[1], [0], [0], [1], [0, 0, 1, 1], [], []>} : vector<1x16xf32>, vector<16x128xf32>, vector<1x128xf32> -> vector<1x128xf32>
    %cst_61 = arith.constant 6.250000e-02 : f32
    %198 = vector.broadcast %cst_61 : f32 to vector<1x128xf32>
    %199 = arith.mulf %197, %198 : vector<1x128xf32>
    %cst_62 = arith.constant 1.000000e-07 : f32
    %200 = vector.broadcast %cst_62 : f32 to vector<1x128xf32>
    %201 = arith.addf %199, %200 : vector<1x128xf32>
    %202 = math.log %201 : vector<1x128xf32>
    %203 = arith.mulf %199, %202 : vector<1x128xf32>
    %204 = vector.shape_cast %203 : vector<1x128xf32> to vector<1x1x128xf32>
    %cst_63 = arith.constant dense<0.000000e+00> : vector<1xf32>
    %205 = vector.multi_reduction <add>, %204, %cst_63 [1, 2] : vector<1x1x128xf32> to vector<1xf32>
    %206 = vector.shape_cast %205 : vector<1xf32> to vector<1x1x1xf32>
    %207 = vector.extract %206[0, 0, 0] : f32 from vector<1x1x1xf32>
    %cst_64 = arith.constant 0.000000e+00 : f32
    %208 = arith.subf %cst_64, %207 : f32
    %209 = math.exp %208 : f32
    %cst_65 = arith.constant -1.000000e+00 : f32
    %210 = vector.broadcast %cst_65 : f32 to vector<8x128xf32>
    %211 = arith.select %17, %84, %210 : vector<8x128xi1>, vector<8x128xf32>
    %cst_66 = arith.constant dense<0xFF800000> : vector<8xf32>
    %212 = vector.multi_reduction <maximumf>, %211, %cst_66 [1] : vector<8x128xf32> to vector<8xf32>
    %213 = vector.shape_cast %212 : vector<8xf32> to vector<8x1xf32>
    %214 = vector.broadcast %213 : vector<8x1xf32> to vector<8x128xf32>
    %215 = arith.cmpf oeq, %211, %214 : vector<8x128xf32>
    %c128_i32_67 = arith.constant 128 : i32
    %216 = vector.broadcast %c128_i32_67 : i32 to vector<8x128xi32>
    %217 = arith.select %215, %12, %216 : vector<8x128xi1>, vector<8x128xi32>
    %cst_68 = arith.constant dense<2147483647> : vector<8xi32>
    %218 = vector.multi_reduction <minsi>, %217, %cst_68 [1] : vector<8x128xi32> to vector<8xi32>
    %219 = vector.shape_cast %218 : vector<8xi32> to vector<8x1xi32>
    %cst_69 = arith.constant -1.000000e+00 : f32
    %220 = vector.broadcast %cst_69 : f32 to vector<8x128xf32>
    %221 = arith.select %17, %139, %220 : vector<8x128xi1>, vector<8x128xf32>
    %cst_70 = arith.constant dense<0xFF800000> : vector<8xf32>
    %222 = vector.multi_reduction <maximumf>, %221, %cst_70 [1] : vector<8x128xf32> to vector<8xf32>
    %223 = vector.shape_cast %222 : vector<8xf32> to vector<8x1xf32>
    %224 = vector.broadcast %223 : vector<8x1xf32> to vector<8x128xf32>
    %225 = arith.cmpf oeq, %221, %224 : vector<8x128xf32>
    %c128_i32_71 = arith.constant 128 : i32
    %226 = vector.broadcast %c128_i32_71 : i32 to vector<8x128xi32>
    %227 = arith.select %225, %12, %226 : vector<8x128xi1>, vector<8x128xi32>
    %cst_72 = arith.constant dense<2147483647> : vector<8xi32>
    %228 = vector.multi_reduction <minsi>, %227, %cst_72 [1] : vector<8x128xi32> to vector<8xi32>
    %229 = vector.shape_cast %228 : vector<8xi32> to vector<8x1xi32>
    %230 = arith.cmpi eq, %178, %229 : vector<8x1xi32>
    %231 = arith.extui %230 : vector<8x1xi1> to vector<8x1xi32>
    %232 = arith.sitofp %231 : vector<8x1xi32> to vector<8x1xf32>
    %233 = vector.shape_cast %232 : vector<8x1xf32> to vector<1x8x1xf32>
    %cst_73 = arith.constant dense<0.000000e+00> : vector<1xf32>
    %234 = vector.multi_reduction <add>, %233, %cst_73 [1, 2] : vector<1x8x1xf32> to vector<1xf32>
    %235 = vector.shape_cast %234 : vector<1xf32> to vector<1x1x1xf32>
    %236 = vector.extract %235[0, 0, 0] : f32 from vector<1x1x1xf32>
    %cst_74 = arith.constant 1.250000e-01 : f32
    %237 = arith.mulf %236, %cst_74 : f32
    %238 = arith.cmpi eq, %179, %219 : vector<8x1xi32>
    %239 = arith.extui %238 : vector<8x1xi1> to vector<8x1xi32>
    %240 = arith.sitofp %239 : vector<8x1xi32> to vector<8x1xf32>
    %241 = vector.shape_cast %240 : vector<8x1xf32> to vector<1x8x1xf32>
    %cst_75 = arith.constant dense<0.000000e+00> : vector<1xf32>
    %242 = vector.multi_reduction <add>, %241, %cst_75 [1, 2] : vector<1x8x1xf32> to vector<1xf32>
    %243 = vector.shape_cast %242 : vector<1xf32> to vector<1x1x1xf32>
    %244 = vector.extract %243[0, 0, 0] : f32 from vector<1x1x1xf32>
    %cst_76 = arith.constant 1.250000e-01 : f32
    %245 = arith.mulf %244, %cst_76 : f32
    %246 = arith.addf %237, %245 : f32
    %cst_77 = arith.constant 5.000000e-01 : f32
    %247 = arith.mulf %cst_77, %246 : f32
    %248 = tpu.iota {dimensions = array<i32: 1>} : vector<1x8xi32>
    %cst_78 = arith.constant 0.000000e+00 : f32
    %249 = vector.broadcast %cst_78 : f32 to vector<1x8xf32>
    %c0_i32 = arith.constant 0 : i32
    %250 = vector.broadcast %c0_i32 : i32 to vector<1x8xi32>
    %251 = arith.cmpi eq, %248, %250 : vector<1x8xi32>
    %cst_79 = arith.constant 0.000000e+00 : f32
    %252 = vector.broadcast %169 : f32 to vector<1x8xf32>
    %253 = vector.broadcast %cst_79 : f32 to vector<1x8xf32>
    %254 = arith.select %251, %252, %253 : vector<1x8xi1>, vector<1x8xf32>
    %255 = arith.addf %249, %254 : vector<1x8xf32>
    %c1_i32 = arith.constant 1 : i32
    %256 = vector.broadcast %c1_i32 : i32 to vector<1x8xi32>
    %257 = arith.cmpi eq, %248, %256 : vector<1x8xi32>
    %cst_80 = arith.constant 0.000000e+00 : f32
    %258 = vector.broadcast %196 : f32 to vector<1x8xf32>
    %259 = vector.broadcast %cst_80 : f32 to vector<1x8xf32>
    %260 = arith.select %257, %258, %259 : vector<1x8xi1>, vector<1x8xf32>
    %261 = arith.addf %255, %260 : vector<1x8xf32>
    %c2_i32 = arith.constant 2 : i32
    %262 = vector.broadcast %c2_i32 : i32 to vector<1x8xi32>
    %263 = arith.cmpi eq, %248, %262 : vector<1x8xi32>
    %cst_81 = arith.constant 0.000000e+00 : f32
    %264 = vector.broadcast %209 : f32 to vector<1x8xf32>
    %265 = vector.broadcast %cst_81 : f32 to vector<1x8xf32>
    %266 = arith.select %263, %264, %265 : vector<1x8xi1>, vector<1x8xf32>
    %267 = arith.addf %261, %266 : vector<1x8xf32>
    %c3_i32 = arith.constant 3 : i32
    %268 = vector.broadcast %c3_i32 : i32 to vector<1x8xi32>
    %269 = arith.cmpi eq, %248, %268 : vector<1x8xi32>
    %cst_82 = arith.constant 0.000000e+00 : f32
    %270 = vector.broadcast %247 : f32 to vector<1x8xf32>
    %271 = vector.broadcast %cst_82 : f32 to vector<1x8xf32>
    %272 = arith.select %269, %270, %271 : vector<1x8xi1>, vector<1x8xf32>
    %273 = arith.addf %267, %272 : vector<1x8xf32>
    %c4_i32 = arith.constant 4 : i32
    %274 = vector.broadcast %c4_i32 : i32 to vector<1x8xi32>
    %275 = arith.cmpi eq, %248, %274 : vector<1x8xi32>
    %cst_83 = arith.constant 0.000000e+00 : f32
    %276 = vector.broadcast %237 : f32 to vector<1x8xf32>
    %277 = vector.broadcast %cst_83 : f32 to vector<1x8xf32>
    %278 = arith.select %275, %276, %277 : vector<1x8xi1>, vector<1x8xf32>
    %279 = arith.addf %273, %278 : vector<1x8xf32>
    %c5_i32 = arith.constant 5 : i32
    %280 = vector.broadcast %c5_i32 : i32 to vector<1x8xi32>
    %281 = arith.cmpi eq, %248, %280 : vector<1x8xi32>
    %cst_84 = arith.constant 0.000000e+00 : f32
    %282 = vector.broadcast %245 : f32 to vector<1x8xf32>
    %283 = vector.broadcast %cst_84 : f32 to vector<1x8xf32>
    %284 = arith.select %281, %282, %283 : vector<1x8xi1>, vector<1x8xf32>
    %285 = arith.addf %279, %284 : vector<1x8xf32>
    %c6_i32 = arith.constant 6 : i32
    %286 = vector.broadcast %c6_i32 : i32 to vector<1x8xi32>
    %287 = arith.cmpi eq, %248, %286 : vector<1x8xi32>
    %cst_85 = arith.constant 8.000000e+00 : f32
    %cst_86 = arith.constant 0.000000e+00 : f32
    %288 = vector.broadcast %cst_85 : f32 to vector<1x8xf32>
    %289 = vector.broadcast %cst_86 : f32 to vector<1x8xf32>
    %290 = arith.select %287, %288, %289 : vector<1x8xi1>, vector<1x8xf32>
    %291 = arith.addf %285, %290 : vector<1x8xf32>
    %c0_87 = arith.constant 0 : index
    %c0_88 = arith.constant 0 : index
    %292 = vector.load %arg2[%c0_87, %c0_88] : memref<1x8xf32, #tpu.memory_space<vmem>>, vector<1x8xf32>
    tpu.vector_store %arg2[%c0_87, %c0_88], %291 {strides = array<i32>} : memref<1x8xf32, #tpu.memory_space<vmem>>, vector<1x8xf32>,
    return
  }
}

</mosaic_0001>

<llo_original>
// kernel: tpu_custom_call.1
$region0: #{tpu_custom_call.1}
  #allocation0 [shape = 'u32[]', space=smem, size = 0x4, offset = 0x4, fixed_abs, tag = 'smem constant byte address 0x4 - core index']
  #allocation1 [shape = 'u32[144,128]{1,0:T(1,128)}', space=vmem, size = 0x12000, scoped, tag = 'internal scratch']
  %s0 = inlined_call_operand.hbm [shape: f32[16,128], index: 0, kind: input, shape index: {}]
  %s1 = inlined_call_operand.hbm [shape: f32[128,128], index: 1, kind: input, shape index: {}]
  %s2 = inlined_call_operand.hbm [shape: f32[1,8], index: 2, kind: output, shape index: {}]
  %s3 = sld [smem:[#allocation0]]
  $region26: #{tpu_custom_call.1} parent=0
    _
  %s5 = ssub.s32 1, %s3
  %s6 = scalar_select 0, %s5, %s3
  $region1: #{tpu_custom_call.1} parent=0
    #allocation2 [shape = 'u8[8192]{0}', space=vmem, size = 0x2000, scoped, tag = 'input window, operand 0, single buffered']
    #allocation3 [shape = 's32[1]{0}', space=sflag, size = 0x4, scoped, tag = 'scoped memory for tpu_custom_call.1']
    #allocation4 [shape = 's32[1]{0}', space=sflag, size = 0x4, scoped, tag = 'scoped memory for tpu_custom_call.1']
    #allocation5 [shape = 'u8[65536]{0}', space=vmem, size = 0x10000, scoped, tag = 'input window, operand 1, single buffered']
    #allocation6 [shape = 's32[1]{0}', space=sflag, size = 0x4, scoped, tag = 'scoped memory for tpu_custom_call.1']
    #allocation7 [shape = 'u8[512]{0}', space=vmem, size = 0x400, scoped, tag = 'output window, operand 0, single buffered']
    %7 = vsyncpa [#allocation3], 0
    %8 = vsyncpa [#allocation6], 0
    %9 = vsyncpa [#allocation4], 0
    // Predicated region
    $region2: #{tpu_custom_call.1} parent=1 // pred_check
      _
    $region3: #{tpu_custom_call.1} parent=1 // pred_check_branch
      %11 = sbr.rel (0) target = $region5
    $region4: #{tpu_custom_call.1} parent=1 // pred_region
      %s13 = ssub.s32 256, 256
      %14 = vsyncadd [#allocation3], %s13
      %s15 = sshll.u32 [#allocation2], 4
      %s16 = int_to_ptr.vmem [resolvable:$true] %s15
      %21 = dma.hbm_to_vmem [thread:$0]  %s0, 256, %s16, [#allocation3], 128, 128, 8
    $region5: #{tpu_custom_call.1} parent=1 // pred_fallthru
      _
    // Predicated region
    $region6: #{tpu_custom_call.1} parent=1 // pred_check
      _
    $region7: #{tpu_custom_call.1} parent=1 // pred_check_branch
      %23 = sbr.rel (0) target = $region9
    $region8: #{tpu_custom_call.1} parent=1 // pred_region
      %s25 = ssub.s32 2048, 2048
      %26 = vsyncadd [#allocation6], %s25
      %s27 = sshll.u32 [#allocation5], 4
      %s28 = int_to_ptr.vmem [resolvable:$true] %s27
      %33 = dma.hbm_to_vmem [thread:$0]  %s1, 2048, %s28, [#allocation6], 128, 128, 8
    $region9: #{tpu_custom_call.1} parent=1 // pred_fallthru
      _
    // Predicated region
    $region10: #{tpu_custom_call.1} parent=1 // pred_check
      _
    $region11: #{tpu_custom_call.1} parent=1 // pred_check_branch
      %35 = sbr.rel (0) target = $region13
    $region12: #{tpu_custom_call.1} parent=1 // pred_region
      %36 = dma.done [#allocation3], 256
    $region13: #{tpu_custom_call.1} parent=1 // pred_fallthru
      _
    // Predicated region
    $region14: #{tpu_custom_call.1} parent=1 // pred_check
      _
    $region15: #{tpu_custom_call.1} parent=1 // pred_check_branch
      %38 = sbr.rel (0) target = $region17
    $region16: #{tpu_custom_call.1} parent=1 // pred_region
      %39 = dma.done [#allocation6], 2048
    $region17: #{tpu_custom_call.1} parent=1 // pred_fallthru
      _
    %v40 = vld [vmem:[#allocation2] sm:$0xff]
    %v41 = vld [vmem:[#allocation2 + $0x8] sm:$0xff]
    %v42 = vld [vmem:[#allocation5] sm:$0xff]
    %v43 = vld [vmem:[#allocation5 + $0x8] sm:$0xff]
    %v44 = vld [vmem:[#allocation5 + $0x10] sm:$0xff]
    %v45 = vld [vmem:[#allocation5 + $0x18] sm:$0xff]
    %v46 = vld [vmem:[#allocation5 + $0x20] sm:$0xff]
    %v47 = vld [vmem:[#allocation5 + $0x28] sm:$0xff]
    %v48 = vld [vmem:[#allocation5 + $0x30] sm:$0xff]
    %v49 = vld [vmem:[#allocation5 + $0x38] sm:$0xff]
    %v50 = vld [vmem:[#allocation5 + $0x40] sm:$0xff]
    %v51 = vld [vmem:[#allocation5 + $0x48] sm:$0xff]
    %v52 = vld [vmem:[#allocation5 + $0x50] sm:$0xff]
    %v53 = vld [vmem:[#allocation5 + $0x58] sm:$0xff]
    %v54 = vld [vmem:[#allocation5 + $0x60] sm:$0xff]
    %v55 = vld [vmem:[#allocation5 + $0x68] sm:$0xff]
    %v56 = vld [vmem:[#allocation5 + $0x70] sm:$0xff]
    %v57 = vld [vmem:[#allocation5 + $0x78] sm:$0xff]
    %v58 = vmul.f32 %v40, %v40
    %v59 = vmul.f32 %v41, %v41
    %60 = vadd.xlane.f32.xlu0 %v58
    %v61 = vpop.xlane.xlu0 %60
    %62 = vadd.xlane.f32.xlu0 %v59
    %v63 = vpop.xlane.xlu0 %62
    %v64 = vmax.f32 %v61, 1e-24
    %v65 = vmax.f32 %v63, 1e-24
    %v66 = vrsqrt.pop %v64
    %v67 = vrsqrt.pop %v65
    %v68 = vmul.f32 %v40, %v66
    %v69 = vmul.f32 %v41, %v67
    %70 = vmatprep.subr.mxu0 0.0
    %71 = vmatpush1.xpose.msra.mxu0 %v57
    %72 = vmatprep.subr.mxu0 0.0
    %73 = vmatpush1.xpose.msra.mxu0 %v56
    %74 = vmatprep.subr.mxu0 0.0
    %75 = vmatpush1.xpose.msra.mxu0 %v55
    %76 = vmatprep.subr.mxu0 0.0
    %77 = vmatpush1.xpose.msra.mxu0 %v54
    %78 = vmatprep.subr.mxu0 0.0
    %79 = vmatpush1.xpose.msra.mxu0 %v53
    %80 = vmatprep.subr.mxu0 0.0
    %81 = vmatpush1.xpose.msra.mxu0 %v52
    %82 = vmatprep.subr.mxu0 0.0
    %83 = vmatpush1.xpose.msra.mxu0 %v51
    %84 = vmatprep.subr.mxu0 0.0
    %85 = vmatpush1.xpose.msra.mxu0 %v50
    %86 = vmatprep.subr.mxu0 0.0
    %87 = vmatpush1.xpose.msra.mxu0 %v49
    %88 = vmatprep.subr.mxu0 0.0
    %89 = vmatpush1.xpose.msra.mxu0 %v48
    %90 = vmatprep.subr.mxu0 0.0
    %91 = vmatpush1.xpose.msra.mxu0 %v47
    %92 = vmatprep.subr.mxu0 0.0
    %93 = vmatpush1.xpose.msra.mxu0 %v46
    %94 = vmatprep.subr.mxu0 0.0
    %95 = vmatpush1.xpose.msra.mxu0 %v45
    %96 = vmatprep.subr.mxu0 0.0
    %97 = vmatpush1.xpose.msra.mxu0 %v44
    %98 = vmatprep.subr.mxu0 0.0
    %99 = vmatpush1.xpose.msra.mxu0 %v43
    %100 = vmatprep.subr.mxu0 0.0
    %101 = vmatpush1.xpose.msra.mxu0 %v42
    %102 = vmatprep.subr.mxu0 0.0
    %103 = vmatpush2.xpose.msra.mxu0 0.0
    %104 = vmatprep.subr.mxu0 0.0
    %105 = vmatpush2.xpose.msra.mxu0 0.0
    %106 = vmatprep.subr.mxu0 0.0
    %107 = vmatpush2.xpose.msra.mxu0 0.0
    %108 = vmatprep.subr.mxu0 0.0
    %109 = vmatpush2.xpose.msra.mxu0 0.0
    %110 = vmatprep.subr.mxu0 0.0
    %111 = vmatpush2.xpose.msra.mxu0 0.0
    %112 = vmatprep.subr.mxu0 0.0
    %113 = vmatpush2.xpose.msra.mxu0 0.0
    %114 = vmatprep.subr.mxu0 0.0
    %115 = vmatpush2.xpose.msra.mxu0 0.0
    %116 = vmatprep.subr.mxu0 0.0
    %117 = vmatpush2.xpose.msra.mxu0 0.0
    %118 = vmatprep.subr.mxu0 0.0
    %119 = vmatpush2.xpose.msra.mxu0 0.0
    %120 = vmatprep.subr.mxu0 0.0
    %121 = vmatpush2.xpose.msra.mxu0 0.0
    %122 = vmatprep.subr.mxu0 0.0
    %123 = vmatpush2.xpose.msra.mxu0 0.0
    %124 = vmatprep.subr.mxu0 0.0
    %125 = vmatpush2.xpose.msra.mxu0 0.0
    %126 = vmatprep.subr.mxu0 0.0
    %127 = vmatpush2.xpose.msra.mxu0 0.0
    %128 = vmatprep.subr.mxu0 0.0
    %129 = vmatpush2.xpose.msra.mxu0 0.0
    %130 = vmatprep.subr.mxu0 0.0
    %131 = vmatpush2.xpose.msra.mxu0 0.0
    %132 = vmatprep.subr.mxu0 0.0
    %133 = vmatpush2.xpose.msra.mxu0 0.0
    %134 = vmatprep.mubr.f32.mxu0 0.0
    %135 = vmatmul.mubr.f32.gmra.mxu0 %v68
    %v136 = vpop.f32.mrf.mxu0
    %v137 = vadd.f32 0.0, %v136
    %v138 = vpop.f32.mrf.mxu0
    %139 = vmatprep.mubr.f32.mxu0 0.0
    %140 = vmatmul.mubr.f32.gmra.mxu0 %v69
    %v141 = vpop.f32.mrf.mxu0
    %v142 = vadd.f32 0.0, %v141
    %v143 = vpop.f32.mrf.mxu0
    %144 = vdwg.mxu0
    %v145 = vlaneseq
    %v146 = vand.u32 %v145, 127
    %vm147 = vcmp.lt.s32.totalorder %v146, 16
    %v148 = vsel %vm147, %v137, -1e+30
    %v149 = vsel %vm147, %v142, -1e+30
    %v150 = vmax.f32 %v148, %v149
    %151 = vmax.xlane.f32.xlu0 %v150
    %v152 = vpop.xlane.xlu0 %151
    %v153 = vrot.slane %v152, 4
    %v154 = vmax.f32 %v152, %v153
    %v155 = vrot.slane %v154, 2
    %v156 = vmax.f32 %v154, %v155
    %v157 = vrot.slane %v156, 1
    %v158 = vmax.f32 %v156, %v157
    %s159 = vtos %v158
    %v160 = vstv %s159
    %v161 = vsub.f32 %v148, %v160
    %v162 = vsub.f32 %v149, %v160
    %v163 = vmul.f32 %v161, 20.0
    %v164 = vmul.f32 %v162, 20.0
    %v165 = vmul.f32 %v163, 1.442695
    %v166 = vpow.pop %v165
    %v167 = vmul.f32 %v164, 1.442695
    %v168 = vpow.pop %v167
    %169 = vadd.xlane.f32.xlu0 %v166
    %v170 = vpop.xlane.xlu0 %169
    %v171 = vrot.slane %v170, 4
    %v172 = vadd.f32 %v170, %v171
    %v173 = vrot.slane %v172, 2
    %v174 = vadd.f32 %v172, %v173
    %v175 = vrot.slane %v174, 1
    %v176 = vadd.f32 %v174, %v175
    %s177 = vtos %v176
    %v178 = vstv %s177
    %v179 = vrcp.pop %v178
    %s180 = vtos %v179
    %v181 = vstv %s180
    %v182 = vmul.f32 %v166, %v181
    %vm183 = vcmask 64512
    %v185 = vsel %vm183, 1.0, 0
    %187 = vmatprep.subr.mxu0 0.0
    %188 = vmatpush1.msra.mxu0 0.0
    %189 = vmatprep.subr.mxu0 0.0
    %190 = vmatpush1.msra.mxu0 0.0
    %191 = vmatprep.subr.mxu0 0.0
    %192 = vmatpush1.msra.mxu0 0.0
    %193 = vmatprep.subr.mxu0 0.0
    %194 = vmatpush1.msra.mxu0 0.0
    %195 = vmatprep.subr.mxu0 0.0
    %196 = vmatpush1.msra.mxu0 0.0
    %197 = vmatprep.subr.mxu0 0.0
    %198 = vmatpush1.msra.mxu0 0.0
    %199 = vmatprep.subr.mxu0 0.0
    %200 = vmatpush1.msra.mxu0 0.0
    %201 = vmatprep.subr.mxu0 0.0
    %202 = vmatpush1.msra.mxu0 0.0
    %203 = vmatprep.subr.mxu0 0.0
    %204 = vmatpush1.msra.mxu0 0.0
    %205 = vmatprep.subr.mxu0 0.0
    %206 = vmatpush1.msra.mxu0 0.0
    %207 = vmatprep.subr.mxu0 0.0
    %208 = vmatpush1.msra.mxu0 0.0
    %209 = vmatprep.subr.mxu0 0.0
    %210 = vmatpush1.msra.mxu0 0.0
    %211 = vmatprep.subr.mxu0 0.0
    %212 = vmatpush1.msra.mxu0 0.0
    %213 = vmatprep.subr.mxu0 0.0
    %214 = vmatpush1.msra.mxu0 0.0
    %215 = vmatprep.subr.mxu0 0.0
    %216 = vmatpush1.msra.mxu0 0.0
    %217 = vmatprep.subr.mxu0 0.0
    %218 = vmatpush1.msra.mxu0 %v182
    %219 = vmatprep.subr.mxu0 0.0
    %220 = vmatpush2.msra.mxu0 0.0
    %221 = vmatprep.subr.mxu0 0.0
    %222 = vmatpush2.msra.mxu0 0.0
    %223 = vmatprep.subr.mxu0 0.0
    %224 = vmatpush2.msra.mxu0 0.0
    %225 = vmatprep.subr.mxu0 0.0
    %226 = vmatpush2.msra.mxu0 0.0
    %227 = vmatprep.subr.mxu0 0.0
    %228 = vmatpush2.msra.mxu0 0.0
    %229 = vmatprep.subr.mxu0 0.0
    %230 = vmatpush2.msra.mxu0 0.0
    %231 = vmatprep.subr.mxu0 0.0
    %232 = vmatpush2.msra.mxu0 0.0
    %233 = vmatprep.subr.mxu0 0.0
    %234 = vmatpush2.msra.mxu0 0.0
    %235 = vmatprep.subr.mxu0 0.0
    %236 = vmatpush2.msra.mxu0 0.0
    %237 = vmatprep.subr.mxu0 0.0
    %238 = vmatpush2.msra.mxu0 0.0
    %239 = vmatprep.subr.mxu0 0.0
    %240 = vmatpush2.msra.mxu0 0.0
    %241 = vmatprep.subr.mxu0 0.0
    %242 = vmatpush2.msra.mxu0 0.0
    %243 = vmatprep.subr.mxu0 0.0
    %244 = vmatpush2.msra.mxu0 0.0
    %245 = vmatprep.subr.mxu0 0.0
    %246 = vmatpush2.msra.mxu0 0.0
    %247 = vmatprep.subr.mxu0 0.0
    %248 = vmatpush2.msra.mxu0 0.0
    %249 = vmatprep.subr.mxu0 0.0
    %250 = vmatpush2.msra.mxu0 0.0
    %251 = vmatprep.mubr.f32.mxu0 0.0
    %252 = vmatmul.mubr.f32.gmra.mxu0 %v185
    %v253 = vpop.f32.mrf.mxu0
    %v254 = vadd.f32 0.0, %v253
    %v255 = vpop.f32.mrf.mxu0
    %256 = vdwg.mxu0
    %v257 = vmul.f32 %v254, 16.0
    %v258 = vsel %vm147, %v257, 1.0
    %v259 = vrcp.pop %v258
    %v260 = vlaneseq
    %v261 = vshrl.u32 %v260, 7
    %v262 = vsub.s32 0, %v261
    %v263 = vrot.slane %v259, %v262
    %v264 = vmul.f32 %v182, %v263
    %265 = vadd.xlane.f32.xlu0 %v264
    %v266 = vpop.xlane.xlu0 %265
    %v267 = vmul.f32 %v266, 8.0
    %v268 = vrcp.pop %v267
    %v269 = vmul.f32 %v264, %v268
    %270 = vmatprep.subr.mxu0 0.0
    %271 = vmatpush1.msra.mxu0 0.0
    %272 = vmatprep.subr.mxu0 0.0
    %273 = vmatpush1.msra.mxu0 0.0
    %274 = vmatprep.subr.mxu0 0.0
    %275 = vmatpush1.msra.mxu0 0.0
    %276 = vmatprep.subr.mxu0 0.0
    %277 = vmatpush1.msra.mxu0 0.0
    %278 = vmatprep.subr.mxu0 0.0
    %279 = vmatpush1.msra.mxu0 0.0
    %280 = vmatprep.subr.mxu0 0.0
    %281 = vmatpush1.msra.mxu0 0.0
    %282 = vmatprep.subr.mxu0 0.0
    %283 = vmatpush1.msra.mxu0 0.0
    %284 = vmatprep.subr.mxu0 0.0
    %285 = vmatpush1.msra.mxu0 0.0
    %286 = vmatprep.subr.mxu0 0.0
    %287 = vmatpush1.msra.mxu0 0.0
    %288 = vmatprep.subr.mxu0 0.0
    %289 = vmatpush1.msra.mxu0 0.0
    %290 = vmatprep.subr.mxu0 0.0
    %291 = vmatpush1.msra.mxu0 0.0
    %292 = vmatprep.subr.mxu0 0.0
    %293 = vmatpush1.msra.mxu0 0.0
    %294 = vmatprep.subr.mxu0 0.0
    %295 = vmatpush1.msra.mxu0 0.0
    %296 = vmatprep.subr.mxu0 0.0
    %297 = vmatpush1.msra.mxu0 0.0
    %298 = vmatprep.subr.mxu0 0.0
    %299 = vmatpush1.msra.mxu0 0.0
    %300 = vmatprep.subr.mxu0 0.0
    %301 = vmatpush1.msra.mxu0 %v269
    %302 = vmatprep.subr.mxu0 0.0
    %303 = vmatpush2.msra.mxu0 0.0
    %304 = vmatprep.subr.mxu0 0.0
    %305 = vmatpush2.msra.mxu0 0.0
    %306 = vmatprep.subr.mxu0 0.0
    %307 = vmatpush2.msra.mxu0 0.0
    %308 = vmatprep.subr.mxu0 0.0
    %309 = vmatpush2.msra.mxu0 0.0
    %310 = vmatprep.subr.mxu0 0.0
    %311 = vmatpush2.msra.mxu0 0.0
    %312 = vmatprep.subr.mxu0 0.0
    %313 = vmatpush2.msra.mxu0 0.0
    %314 = vmatprep.subr.mxu0 0.0
    %315 = vmatpush2.msra.mxu0 0.0
    %316 = vmatprep.subr.mxu0 0.0
    %317 = vmatpush2.msra.mxu0 0.0
    %318 = vmatprep.subr.mxu0 0.0
    %319 = vmatpush2.msra.mxu0 0.0
    %320 = vmatprep.subr.mxu0 0.0
    %321 = vmatpush2.msra.mxu0 0.0
    %322 = vmatprep.subr.mxu0 0.0
    %323 = vmatpush2.msra.mxu0 0.0
    %324 = vmatprep.subr.mxu0 0.0
    %325 = vmatpush2.msra.mxu0 0.0
    %326 = vmatprep.subr.mxu0 0.0
    %327 = vmatpush2.msra.mxu0 0.0
    %328 = vmatprep.subr.mxu0 0.0
    %329 = vmatpush2.msra.mxu0 0.0
    %330 = vmatprep.subr.mxu0 0.0
    %331 = vmatpush2.msra.mxu0 0.0
    %332 = vmatprep.subr.mxu0 0.0
    %333 = vmatpush2.msra.mxu0 0.0
    %334 = vmatprep.mubr.f32.mxu0 0.0
    %335 = vmatmul.mubr.f32.gmra.mxu0 %v185
    %v336 = vpop.f32.mrf.mxu0
    %v337 = vadd.f32 0.0, %v336
    %v338 = vpop.f32.mrf.mxu0
    %339 = vdwg.mxu0
    %v340 = vmul.f32 %v337, 16.0
    %v341 = vsel %vm147, %v340, 1.0
    %v342 = vrcp.pop %v341
    %v343 = vlaneseq
    %v344 = vshrl.u32 %v343, 7
    %v345 = vsub.s32 0, %v344
    %v346 = vrot.slane %v342, %v345
    %v347 = vmul.f32 %v269, %v346
    %348 = vadd.xlane.f32.xlu0 %v347
    %v349 = vpop.xlane.xlu0 %348
    %v350 = vmul.f32 %v349, 8.0
    %v351 = vrcp.pop %v350
    %v352 = vmul.f32 %v347, %v351
    %353 = vmatprep.subr.mxu0 0.0
    %354 = vmatpush1.msra.mxu0 0.0
    %355 = vmatprep.subr.mxu0 0.0
    %356 = vmatpush1.msra.mxu0 0.0
    %357 = vmatprep.subr.mxu0 0.0
    %358 = vmatpush1.msra.mxu0 0.0
    %359 = vmatprep.subr.mxu0 0.0
    %360 = vmatpush1.msra.mxu0 0.0
    %361 = vmatprep.subr.mxu0 0.0
    %362 = vmatpush1.msra.mxu0 0.0
    %363 = vmatprep.subr.mxu0 0.0
    %364 = vmatpush1.msra.mxu0 0.0
    %365 = vmatprep.subr.mxu0 0.0
    %366 = vmatpush1.msra.mxu0 0.0
    %367 = vmatprep.subr.mxu0 0.0
    %368 = vmatpush1.msra.mxu0 0.0
    %369 = vmatprep.subr.mxu0 0.0
    %370 = vmatpush1.msra.mxu0 0.0
    %371 = vmatprep.subr.mxu0 0.0
    %372 = vmatpush1.msra.mxu0 0.0
    %373 = vmatprep.subr.mxu0 0.0
    %374 = vmatpush1.msra.mxu0 0.0
    %375 = vmatprep.subr.mxu0 0.0
    %376 = vmatpush1.msra.mxu0 0.0
    %377 = vmatprep.subr.mxu0 0.0
    %378 = vmatpush1.msra.mxu0 0.0
    %379 = vmatprep.subr.mxu0 0.0
    %380 = vmatpush1.msra.mxu0 0.0
    %381 = vmatprep.subr.mxu0 0.0
    %382 = vmatpush1.msra.mxu0 0.0
    %383 = vmatprep.subr.mxu0 0.0
    %384 = vmatpush1.msra.mxu0 %v352
    %385 = vmatprep.subr.mxu0 0.0
    %386 = vmatpush2.msra.mxu0 0.0
    %387 = vmatprep.subr.mxu0 0.0
    %388 = vmatpush2.msra.mxu0 0.0
    %389 = vmatprep.subr.mxu0 0.0
    %390 = vmatpush2.msra.mxu0 0.0
    %391 = vmatprep.subr.mxu0 0.0
    %392 = vmatpush2.msra.mxu0 0.0
    %393 = vmatprep.subr.mxu0 0.0
    %394 = vmatpush2.msra.mxu0 0.0
    %395 = vmatprep.subr.mxu0 0.0
    %396 = vmatpush2.msra.mxu0 0.0
    %397 = vmatprep.subr.mxu0 0.0
    %398 = vmatpush2.msra.mxu0 0.0
    %399 = vmatprep.subr.mxu0 0.0
    %400 = vmatpush2.msra.mxu0 0.0
    %401 = vmatprep.subr.mxu0 0.0
    %402 = vmatpush2.msra.mxu0 0.0
    %403 = vmatprep.subr.mxu0 0.0
    %404 = vmatpush2.msra.mxu0 0.0
    %405 = vmatprep.subr.mxu0 0.0
    %406 = vmatpush2.msra.mxu0 0.0
    %407 = vmatprep.subr.mxu0 0.0
    %408 = vmatpush2.msra.mxu0 0.0
    %409 = vmatprep.subr.mxu0 0.0
    %410 = vmatpush2.msra.mxu0 0.0
    %411 = vmatprep.subr.mxu0 0.0
    %412 = vmatpush2.msra.mxu0 0.0
    %413 = vmatprep.subr.mxu0 0.0
    %414 = vmatpush2.msra.mxu0 0.0
    %415 = vmatprep.subr.mxu0 0.0
    %416 = vmatpush2.msra.mxu0 0.0
    %417 = vmatprep.mubr.f32.mxu0 0.0
    %418 = vmatmul.mubr.f32.gmra.mxu0 %v185
    %v419 = vpop.f32.mrf.mxu0
    %v420 = vadd.f32 0.0, %v419
    %v421 = vpop.f32.mrf.mxu0
    %422 = vdwg.mxu0
    %v423 = vmul.f32 %v420, 16.0
    %v424 = vsel %vm147, %v423, 1.0
    %v425 = vrcp.pop %v424
    %v426 = vlaneseq
    %v427 = vshrl.u32 %v426, 7
    %v428 = vsub.s32 0, %v427
    %v429 = vrot.slane %v425, %v428
    %v430 = vmul.f32 %v352, %v429
    %431 = vadd.xlane.f32.xlu0 %v430
    %v432 = vpop.xlane.xlu0 %431
    %v433 = vmul.f32 %v432, 8.0
    %v434 = vrcp.pop %v433
    %v435 = vmul.f32 %v430, %v434
    %v436 = vmul.f32 %v435, 8.0
    %437 = vadd.xlane.f32.xlu0 %v168
    %v438 = vpop.xlane.xlu0 %437
    %v439 = vrot.slane %v438, 4
    %v440 = vadd.f32 %v438, %v439
    %v441 = vrot.slane %v440, 2
    %v442 = vadd.f32 %v440, %v441
    %v443 = vrot.slane %v442, 1
    %v444 = vadd.f32 %v442, %v443
    %s445 = vtos %v444
    %v446 = vstv %s445
    %v447 = vrcp.pop %v446
    %s448 = vtos %v447
    %v449 = vstv %s448
    %v450 = vmul.f32 %v168, %v449
    %451 = vmatprep.subr.mxu0 0.0
    %452 = vmatpush1.msra.mxu0 0.0
    %453 = vmatprep.subr.mxu0 0.0
    %454 = vmatpush1.msra.mxu0 0.0
    %455 = vmatprep.subr.mxu0 0.0
    %456 = vmatpush1.msra.mxu0 0.0
    %457 = vmatprep.subr.mxu0 0.0
    %458 = vmatpush1.msra.mxu0 0.0
    %459 = vmatprep.subr.mxu0 0.0
    %460 = vmatpush1.msra.mxu0 0.0
    %461 = vmatprep.subr.mxu0 0.0
    %462 = vmatpush1.msra.mxu0 0.0
    %463 = vmatprep.subr.mxu0 0.0
    %464 = vmatpush1.msra.mxu0 0.0
    %465 = vmatprep.subr.mxu0 0.0
    %466 = vmatpush1.msra.mxu0 0.0
    %467 = vmatprep.subr.mxu0 0.0
    %468 = vmatpush1.msra.mxu0 0.0
    %469 = vmatprep.subr.mxu0 0.0
    %470 = vmatpush1.msra.mxu0 0.0
    %471 = vmatprep.subr.mxu0 0.0
    %472 = vmatpush1.msra.mxu0 0.0
    %473 = vmatprep.subr.mxu0 0.0
    %474 = vmatpush1.msra.mxu0 0.0
    %475 = vmatprep.subr.mxu0 0.0
    %476 = vmatpush1.msra.mxu0 0.0
    %477 = vmatprep.subr.mxu0 0.0
    %478 = vmatpush1.msra.mxu0 0.0
    %479 = vmatprep.subr.mxu0 0.0
    %480 = vmatpush1.msra.mxu0 0.0
    %481 = vmatprep.subr.mxu0 0.0
    %482 = vmatpush1.msra.mxu0 %v450
    %483 = vmatprep.subr.mxu0 0.0
    %484 = vmatpush2.msra.mxu0 0.0
    %485 = vmatprep.subr.mxu0 0.0
    %486 = vmatpush2.msra.mxu0 0.0
    %487 = vmatprep.subr.mxu0 0.0
    %488 = vmatpush2.msra.mxu0 0.0
    %489 = vmatprep.subr.mxu0 0.0
    %490 = vmatpush2.msra.mxu0 0.0
    %491 = vmatprep.subr.mxu0 0.0
    %492 = vmatpush2.msra.mxu0 0.0
    %493 = vmatprep.subr.mxu0 0.0
    %494 = vmatpush2.msra.mxu0 0.0
    %495 = vmatprep.subr.mxu0 0.0
    %496 = vmatpush2.msra.mxu0 0.0
    %497 = vmatprep.subr.mxu0 0.0
    %498 = vmatpush2.msra.mxu0 0.0
    %499 = vmatprep.subr.mxu0 0.0
    %500 = vmatpush2.msra.mxu0 0.0
    %501 = vmatprep.subr.mxu0 0.0
    %502 = vmatpush2.msra.mxu0 0.0
    %503 = vmatprep.subr.mxu0 0.0
    %504 = vmatpush2.msra.mxu0 0.0
    %505 = vmatprep.subr.mxu0 0.0
    %506 = vmatpush2.msra.mxu0 0.0
    %507 = vmatprep.subr.mxu0 0.0
    %508 = vmatpush2.msra.mxu0 0.0
    %509 = vmatprep.subr.mxu0 0.0
    %510 = vmatpush2.msra.mxu0 0.0
    %511 = vmatprep.subr.mxu0 0.0
    %512 = vmatpush2.msra.mxu0 0.0
    %513 = vmatprep.subr.mxu0 0.0
    %514 = vmatpush2.msra.mxu0 0.0
    %515 = vmatprep.mubr.f32.mxu0 0.0
    %516 = vmatmul.mubr.f32.gmra.mxu0 %v185
    %v517 = vpop.f32.mrf.mxu0
    %v518 = vadd.f32 0.0, %v517
    %v519 = vpop.f32.mrf.mxu0
    %520 = vdwg.mxu0
    %v521 = vmul.f32 %v518, 16.0
    %v522 = vsel %vm147, %v521, 1.0
    %v523 = vrcp.pop %v522
    %v524 = vlaneseq
    %v525 = vshrl.u32 %v524, 7
    %v526 = vsub.s32 0, %v525
    %v527 = vrot.slane %v523, %v526
    %v528 = vmul.f32 %v450, %v527
    %529 = vadd.xlane.f32.xlu0 %v528
    %v530 = vpop.xlane.xlu0 %529
    %v531 = vmul.f32 %v530, 8.0
    %v532 = vrcp.pop %v531
    %v533 = vmul.f32 %v528, %v532
    %534 = vmatprep.subr.mxu0 0.0
    %535 = vmatpush1.msra.mxu0 0.0
    %536 = vmatprep.subr.mxu0 0.0
    %537 = vmatpush1.msra.mxu0 0.0
    %538 = vmatprep.subr.mxu0 0.0
    %539 = vmatpush1.msra.mxu0 0.0
    %540 = vmatprep.subr.mxu0 0.0
    %541 = vmatpush1.msra.mxu0 0.0
    %542 = vmatprep.subr.mxu0 0.0
    %543 = vmatpush1.msra.mxu0 0.0
    %544 = vmatprep.subr.mxu0 0.0
    %545 = vmatpush1.msra.mxu0 0.0
    %546 = vmatprep.subr.mxu0 0.0
    %547 = vmatpush1.msra.mxu0 0.0
    %548 = vmatprep.subr.mxu0 0.0
    %549 = vmatpush1.msra.mxu0 0.0
    %550 = vmatprep.subr.mxu0 0.0
    %551 = vmatpush1.msra.mxu0 0.0
    %552 = vmatprep.subr.mxu0 0.0
    %553 = vmatpush1.msra.mxu0 0.0
    %554 = vmatprep.subr.mxu0 0.0
    %555 = vmatpush1.msra.mxu0 0.0
    %556 = vmatprep.subr.mxu0 0.0
    %557 = vmatpush1.msra.mxu0 0.0
    %558 = vmatprep.subr.mxu0 0.0
    %559 = vmatpush1.msra.mxu0 0.0
    %560 = vmatprep.subr.mxu0 0.0
    %561 = vmatpush1.msra.mxu0 0.0
    %562 = vmatprep.subr.mxu0 0.0
    %563 = vmatpush1.msra.mxu0 0.0
    %564 = vmatprep.subr.mxu0 0.0
    %565 = vmatpush1.msra.mxu0 %v533
    %566 = vmatprep.subr.mxu0 0.0
    %567 = vmatpush2.msra.mxu0 0.0
    %568 = vmatprep.subr.mxu0 0.0
    %569 = vmatpush2.msra.mxu0 0.0
    %570 = vmatprep.subr.mxu0 0.0
    %571 = vmatpush2.msra.mxu0 0.0
    %572 = vmatprep.subr.mxu0 0.0
    %573 = vmatpush2.msra.mxu0 0.0
    %574 = vmatprep.subr.mxu0 0.0
    %575 = vmatpush2.msra.mxu0 0.0
    %576 = vmatprep.subr.mxu0 0.0
    %577 = vmatpush2.msra.mxu0 0.0
    %578 = vmatprep.subr.mxu0 0.0
    %579 = vmatpush2.msra.mxu0 0.0
    %580 = vmatprep.subr.mxu0 0.0
    %581 = vmatpush2.msra.mxu0 0.0
    %582 = vmatprep.subr.mxu0 0.0
    %583 = vmatpush2.msra.mxu0 0.0
    %584 = vmatprep.subr.mxu0 0.0
    %585 = vmatpush2.msra.mxu0 0.0
    %586 = vmatprep.subr.mxu0 0.0
    %587 = vmatpush2.msra.mxu0 0.0
    %588 = vmatprep.subr.mxu0 0.0
    %589 = vmatpush2.msra.mxu0 0.0
    %590 = vmatprep.subr.mxu0 0.0
    %591 = vmatpush2.msra.mxu0 0.0
    %592 = vmatprep.subr.mxu0 0.0
    %593 = vmatpush2.msra.mxu0 0.0
    %594 = vmatprep.subr.mxu0 0.0
    %595 = vmatpush2.msra.mxu0 0.0
    %596 = vmatprep.subr.mxu0 0.0
    %597 = vmatpush2.msra.mxu0 0.0
    %598 = vmatprep.mubr.f32.mxu0 0.0
    %599 = vmatmul.mubr.f32.gmra.mxu0 %v185
    %v600 = vpop.f32.mrf.mxu0
    %v601 = vadd.f32 0.0, %v600
    %v602 = vpop.f32.mrf.mxu0
    %603 = vdwg.mxu0
    %v604 = vmul.f32 %v601, 16.0
    %v605 = vsel %vm147, %v604, 1.0
    %v606 = vrcp.pop %v605
    %v607 = vlaneseq
    %v608 = vshrl.u32 %v607, 7
    %v609 = vsub.s32 0, %v608
    %v610 = vrot.slane %v606, %v609
    %v611 = vmul.f32 %v533, %v610
    %612 = vadd.xlane.f32.xlu0 %v611
    %v613 = vpop.xlane.xlu0 %612
    %v614 = vmul.f32 %v613, 8.0
    %v615 = vrcp.pop %v614
    %v616 = vmul.f32 %v611, %v615
    %617 = vmatprep.subr.mxu0 0.0
    %618 = vmatpush1.msra.mxu0 0.0
    %619 = vmatprep.subr.mxu0 0.0
    %620 = vmatpush1.msra.mxu0 0.0
    %621 = vmatprep.subr.mxu0 0.0
    %622 = vmatpush1.msra.mxu0 0.0
    %623 = vmatprep.subr.mxu0 0.0
    %624 = vmatpush1.msra.mxu0 0.0
    %625 = vmatprep.subr.mxu0 0.0
    %626 = vmatpush1.msra.mxu0 0.0
    %627 = vmatprep.subr.mxu0 0.0
    %628 = vmatpush1.msra.mxu0 0.0
    %629 = vmatprep.subr.mxu0 0.0
    %630 = vmatpush1.msra.mxu0 0.0
    %631 = vmatprep.subr.mxu0 0.0
    %632 = vmatpush1.msra.mxu0 0.0
    %633 = vmatprep.subr.mxu0 0.0
    %634 = vmatpush1.msra.mxu0 0.0
    %635 = vmatprep.subr.mxu0 0.0
    %636 = vmatpush1.msra.mxu0 0.0
    %637 = vmatprep.subr.mxu0 0.0
    %638 = vmatpush1.msra.mxu0 0.0
    %639 = vmatprep.subr.mxu0 0.0
    %640 = vmatpush1.msra.mxu0 0.0
    %641 = vmatprep.subr.mxu0 0.0
    %642 = vmatpush1.msra.mxu0 0.0
    %643 = vmatprep.subr.mxu0 0.0
    %644 = vmatpush1.msra.mxu0 0.0
    %645 = vmatprep.subr.mxu0 0.0
    %646 = vmatpush1.msra.mxu0 0.0
    %647 = vmatprep.subr.mxu0 0.0
    %648 = vmatpush1.msra.mxu0 %v616
    %649 = vmatprep.subr.mxu0 0.0
    %650 = vmatpush2.msra.mxu0 0.0
    %651 = vmatprep.subr.mxu0 0.0
    %652 = vmatpush2.msra.mxu0 0.0
    %653 = vmatprep.subr.mxu0 0.0
    %654 = vmatpush2.msra.mxu0 0.0
    %655 = vmatprep.subr.mxu0 0.0
    %656 = vmatpush2.msra.mxu0 0.0
    %657 = vmatprep.subr.mxu0 0.0
    %658 = vmatpush2.msra.mxu0 0.0
    %659 = vmatprep.subr.mxu0 0.0
    %660 = vmatpush2.msra.mxu0 0.0
    %661 = vmatprep.subr.mxu0 0.0
    %662 = vmatpush2.msra.mxu0 0.0
    %663 = vmatprep.subr.mxu0 0.0
    %664 = vmatpush2.msra.mxu0 0.0
    %665 = vmatprep.subr.mxu0 0.0
    %666 = vmatpush2.msra.mxu0 0.0
    %667 = vmatprep.subr.mxu0 0.0
    %668 = vmatpush2.msra.mxu0 0.0
    %669 = vmatprep.subr.mxu0 0.0
    %670 = vmatpush2.msra.mxu0 0.0
    %671 = vmatprep.subr.mxu0 0.0
    %672 = vmatpush2.msra.mxu0 0.0
    %673 = vmatprep.subr.mxu0 0.0
    %674 = vmatpush2.msra.mxu0 0.0
    %675 = vmatprep.subr.mxu0 0.0
    %676 = vmatpush2.msra.mxu0 0.0
    %677 = vmatprep.subr.mxu0 0.0
    %678 = vmatpush2.msra.mxu0 0.0
    %679 = vmatprep.subr.mxu0 0.0
    %680 = vmatpush2.msra.mxu0 0.0
    %681 = vmatprep.mubr.f32.mxu0 0.0
    %682 = vmatmul.mubr.f32.gmra.mxu0 %v185
    %v683 = vpop.f32.mrf.mxu0
    %v684 = vadd.f32 0.0, %v683
    %v685 = vpop.f32.mrf.mxu0
    %686 = vdwg.mxu0
    %v687 = vmul.f32 %v684, 16.0
    %v688 = vsel %vm147, %v687, 1.0
    %v689 = vrcp.pop %v688
    %v690 = vlaneseq
    %v691 = vshrl.u32 %v690, 7
    %v692 = vsub.s32 0, %v691
    %v693 = vrot.slane %v689, %v692
    %v694 = vmul.f32 %v616, %v693
    %695 = vadd.xlane.f32.xlu0 %v694
    %v696 = vpop.xlane.xlu0 %695
    %v697 = vmul.f32 %v696, 8.0
    %v698 = vrcp.pop %v697
    %v699 = vmul.f32 %v694, %v698
    %v700 = vmul.f32 %v699, 8.0
    %v701 = vmul.f32 %v148, 10.0
    %v702 = vmul.f32 %v149, 10.0
    %703 = vmax.xlane.f32.xlu0 %v701
    %v704 = vpop.xlane.xlu0 %703
    %705 = vmax.xlane.f32.xlu0 %v702
    %v706 = vpop.xlane.xlu0 %705
    %v707 = vsub.f32 %v701, %v704
    %v708 = vsub.f32 %v702, %v706
    %v709 = vmul.f32 %v707, 1.442695
    %v710 = vpow.pop %v709
    %v711 = vmul.f32 %v708, 1.442695
    %v712 = vpow.pop %v711
    %713 = vadd.xlane.f32.xlu0 %v710
    %v714 = vpop.xlane.xlu0 %713
    %715 = vadd.xlane.f32.xlu0 %v712
    %v716 = vpop.xlane.xlu0 %715
    %v717 = vlog2.pop %v714
    %v718 = vmul.f32 %v717, 0.6931472
    %v719 = vlog2.pop %v716
    %v720 = vmul.f32 %v719, 0.6931472
    %v721 = vsub.f32 %v707, %v718
    %v722 = vsub.f32 %v708, %v720
    %v723 = vrcp.pop %v714
    %v724 = vrcp.pop %v716
    %v725 = vmul.f32 %v710, %v723
    %v726 = vmul.f32 %v712, %v724
    %v727 = vmul.f32 %v436, %v722
    %728 = vadd.xlane.f32.xlu0 %v727
    %v729 = vpop.xlane.xlu0 %728
    %v730 = vrot.slane %v729, 4
    %v731 = vadd.f32 %v729, %v730
    %v732 = vrot.slane %v731, 2
    %v733 = vadd.f32 %v731, %v732
    %v734 = vrot.slane %v733, 1
    %v735 = vadd.f32 %v733, %v734
    %s736 = vtos %v735
    %v737 = vmul.f32 %v700, %v721
    %738 = vadd.xlane.f32.xlu0 %v737
    %v739 = vpop.xlane.xlu0 %738
    %v740 = vrot.slane %v739, 4
    %v741 = vadd.f32 %v739, %v740
    %v742 = vrot.slane %v741, 2
    %v743 = vadd.f32 %v741, %v742
    %v744 = vrot.slane %v743, 1
    %v745 = vadd.f32 %v743, %v744
    %s746 = vtos %v745
    %s747 = sadd.f32 %s736, %s746
    %s748 = smul.f32 %s747, 0.125
    %s749 = smul.f32 %s748, -0.5
    %vm750 = vcmp.eq.f32.partialorder %v701, %v704
    %vm751 = vcmp.eq.f32.partialorder %v702, %v706
    %v752 = vsel %vm750, %v146, 128
    %v753 = vsel %vm751, %v146, 128
    %v754 = vand.u32 %v752, 65535
    %v755 = vshra.s32 %v752, 16
    %v756 = vcvt.s32.f32 %v754
    %v757 = vcvt.s32.f32 %v755
    %758 = vmin.xlane.f32.xlu0 %v757
    %v759 = vpop.xlane.xlu0 %758
    %vm760 = vcmp.eq.f32.partialorder %v757, %v759
    %v761 = vsel %vm760, %v756, inf
    %762 = vmin.xlane.f32.xlu0 %v761
    %v763 = vpop.xlane.xlu0 %762
    %v764 = vcvt.f32.s32 %v763
    %v765 = vcvt.f32.s32 %v759
    %v766 = vshll.u32 %v765, 16
    %v767 = vadd.s32 %v766, %v764
    %v768 = vand.u32 %v753, 65535
    %v769 = vshra.s32 %v753, 16
    %v770 = vcvt.s32.f32 %v768
    %v771 = vcvt.s32.f32 %v769
    %772 = vmin.xlane.f32.xlu0 %v771
    %v773 = vpop.xlane.xlu0 %772
    %vm774 = vcmp.eq.f32.partialorder %v771, %v773
    %v775 = vsel %vm774, %v770, inf
    %776 = vmin.xlane.f32.xlu0 %v775
    %v777 = vpop.xlane.xlu0 %776
    %v778 = vcvt.f32.s32 %v777
    %v779 = vcvt.f32.s32 %v773
    %v780 = vshll.u32 %v779, 16
    %v781 = vadd.s32 %v780, %v778
    %vm782 = vcmp.eq.s32.totalorder %v146, %v767
    %vm783 = vcmp.eq.s32.totalorder %v146, %v781
    %v784 = vsel %vm782, 1, 0
    %v785 = vsel %vm783, 1, 0
    %v786 = vcvt.s32.f32 %v784
    %v787 = vcvt.s32.f32 %v785
    %vm788 = vcmask 130048
    %v789 = vsel %vm788, 1.0, 0
    %791 = vmatprep.subr.mxu0 0.0
    %792 = vmatpush1.msra.mxu0 0.0
    %793 = vmatprep.subr.mxu0 0.0
    %794 = vmatpush1.msra.mxu0 0.0
    %795 = vmatprep.subr.mxu0 0.0
    %796 = vmatpush1.msra.mxu0 0.0
    %797 = vmatprep.subr.mxu0 0.0
    %798 = vmatpush1.msra.mxu0 0.0
    %799 = vmatprep.subr.mxu0 0.0
    %800 = vmatpush1.msra.mxu0 0.0
    %801 = vmatprep.subr.mxu0 0.0
    %802 = vmatpush1.msra.mxu0 0.0
    %803 = vmatprep.subr.mxu0 0.0
    %804 = vmatpush1.msra.mxu0 0.0
    %805 = vmatprep.subr.mxu0 0.0
    %806 = vmatpush1.msra.mxu0 0.0
    %807 = vmatprep.subr.mxu0 0.0
    %808 = vmatpush1.msra.mxu0 0.0
    %809 = vmatprep.subr.mxu0 0.0
    %810 = vmatpush1.msra.mxu0 0.0
    %811 = vmatprep.subr.mxu0 0.0
    %812 = vmatpush1.msra.mxu0 0.0
    %813 = vmatprep.subr.mxu0 0.0
    %814 = vmatpush1.msra.mxu0 0.0
    %815 = vmatprep.subr.mxu0 0.0
    %816 = vmatpush1.msra.mxu0 0.0
    %817 = vmatprep.subr.mxu0 0.0
    %818 = vmatpush1.msra.mxu0 0.0
    %819 = vmatprep.subr.mxu0 0.0
    %820 = vmatpush1.msra.mxu0 %v787
    %821 = vmatprep.subr.mxu0 0.0
    %822 = vmatpush1.msra.mxu0 %v786
    %823 = vmatprep.subr.mxu0 0.0
    %824 = vmatpush2.msra.mxu0 0.0
    %825 = vmatprep.subr.mxu0 0.0
    %826 = vmatpush2.msra.mxu0 0.0
    %827 = vmatprep.subr.mxu0 0.0
    %828 = vmatpush2.msra.mxu0 0.0
    %829 = vmatprep.subr.mxu0 0.0
    %830 = vmatpush2.msra.mxu0 0.0
    %831 = vmatprep.subr.mxu0 0.0
    %832 = vmatpush2.msra.mxu0 0.0
    %833 = vmatprep.subr.mxu0 0.0
    %834 = vmatpush2.msra.mxu0 0.0
    %835 = vmatprep.subr.mxu0 0.0
    %836 = vmatpush2.msra.mxu0 0.0
    %837 = vmatprep.subr.mxu0 0.0
    %838 = vmatpush2.msra.mxu0 0.0
    %839 = vmatprep.subr.mxu0 0.0
    %840 = vmatpush2.msra.mxu0 0.0
    %841 = vmatprep.subr.mxu0 0.0
    %842 = vmatpush2.msra.mxu0 0.0
    %843 = vmatprep.subr.mxu0 0.0
    %844 = vmatpush2.msra.mxu0 0.0
    %845 = vmatprep.subr.mxu0 0.0
    %846 = vmatpush2.msra.mxu0 0.0
    %847 = vmatprep.subr.mxu0 0.0
    %848 = vmatpush2.msra.mxu0 0.0
    %849 = vmatprep.subr.mxu0 0.0
    %850 = vmatpush2.msra.mxu0 0.0
    %851 = vmatprep.subr.mxu0 0.0
    %852 = vmatpush2.msra.mxu0 0.0
    %853 = vmatprep.subr.mxu0 0.0
    %854 = vmatpush2.msra.mxu0 0.0
    %855 = vmatprep.mubr.f32.mxu0 0.0
    %856 = vmatmul.mubr.f32.gmra.mxu0 %v789
    %v857 = vpop.f32.mrf.mxu0
    %v858 = vadd.f32 0.0, %v857
    %v859 = vpop.f32.mrf.mxu0
    %860 = vdwg.mxu0
    %v861 = vmul.f32 %v858, 0.0625
    %v862 = vadd.f32 %v861, 1e-07
    %v863 = vlog2.pop %v862
    %v864 = vmul.f32 %v863, 0.6931472
    %v865 = vmul.f32 %v861, %v864
    %vm866 = vcmask 1040384
    %v867 = vsel %vm866, %v865, 0.0
    %868 = vadd.xlane.f32.xlu0 %v867
    %v869 = vpop.xlane.xlu0 %868
    %v870 = vrot.slane %v869, 4
    %v871 = vadd.f32 %v869, %v870
    %v872 = vrot.slane %v871, 2
    %v873 = vadd.f32 %v871, %v872
    %v874 = vrot.slane %v873, 1
    %v875 = vadd.f32 %v873, %v874
    %s876 = vtos %v875
    %s877 = ssub.f32 0.0, %s876
    %v878 = vstv %s877
    %v879 = vmul.f32 %v878, 1.442695
    %v880 = vpow.pop %v879
    %s881 = vtos %v880
    %882 = vmatprep.subr.mxu0 0.0
    %883 = vmatpush1.msra.mxu0 0.0
    %884 = vmatprep.subr.mxu0 0.0
    %885 = vmatpush1.msra.mxu0 0.0
    %886 = vmatprep.subr.mxu0 0.0
    %887 = vmatpush1.msra.mxu0 0.0
    %888 = vmatprep.subr.mxu0 0.0
    %889 = vmatpush1.msra.mxu0 0.0
    %890 = vmatprep.subr.mxu0 0.0
    %891 = vmatpush1.msra.mxu0 0.0
    %892 = vmatprep.subr.mxu0 0.0
    %893 = vmatpush1.msra.mxu0 0.0
    %894 = vmatprep.subr.mxu0 0.0
    %895 = vmatpush1.msra.mxu0 0.0
    %896 = vmatprep.subr.mxu0 0.0
    %897 = vmatpush1.msra.mxu0 0.0
    %898 = vmatprep.subr.mxu0 0.0
    %899 = vmatpush1.msra.mxu0 0.0
    %900 = vmatprep.subr.mxu0 0.0
    %901 = vmatpush1.msra.mxu0 0.0
    %902 = vmatprep.subr.mxu0 0.0
    %903 = vmatpush1.msra.mxu0 0.0
    %904 = vmatprep.subr.mxu0 0.0
    %905 = vmatpush1.msra.mxu0 0.0
    %906 = vmatprep.subr.mxu0 0.0
    %907 = vmatpush1.msra.mxu0 0.0
    %908 = vmatprep.subr.mxu0 0.0
    %909 = vmatpush1.msra.mxu0 0.0
    %910 = vmatprep.subr.mxu0 0.0
    %911 = vmatpush1.msra.mxu0 %v726
    %912 = vmatprep.subr.mxu0 0.0
    %913 = vmatpush1.msra.mxu0 %v725
    %914 = vmatprep.subr.mxu0 0.0
    %915 = vmatpush2.msra.mxu0 0.0
    %916 = vmatprep.subr.mxu0 0.0
    %917 = vmatpush2.msra.mxu0 0.0
    %918 = vmatprep.subr.mxu0 0.0
    %919 = vmatpush2.msra.mxu0 0.0
    %920 = vmatprep.subr.mxu0 0.0
    %921 = vmatpush2.msra.mxu0 0.0
    %922 = vmatprep.subr.mxu0 0.0
    %923 = vmatpush2.msra.mxu0 0.0
    %924 = vmatprep.subr.mxu0 0.0
    %925 = vmatpush2.msra.mxu0 0.0
    %926 = vmatprep.subr.mxu0 0.0
    %927 = vmatpush2.msra.mxu0 0.0
    %928 = vmatprep.subr.mxu0 0.0
    %929 = vmatpush2.msra.mxu0 0.0
    %930 = vmatprep.subr.mxu0 0.0
    %931 = vmatpush2.msra.mxu0 0.0
    %932 = vmatprep.subr.mxu0 0.0
    %933 = vmatpush2.msra.mxu0 0.0
    %934 = vmatprep.subr.mxu0 0.0
    %935 = vmatpush2.msra.mxu0 0.0
    %936 = vmatprep.subr.mxu0 0.0
    %937 = vmatpush2.msra.mxu0 0.0
    %938 = vmatprep.subr.mxu0 0.0
    %939 = vmatpush2.msra.mxu0 0.0
    %940 = vmatprep.subr.mxu0 0.0
    %941 = vmatpush2.msra.mxu0 0.0
    %942 = vmatprep.subr.mxu0 0.0
    %943 = vmatpush2.msra.mxu0 0.0
    %944 = vmatprep.subr.mxu0 0.0
    %945 = vmatpush2.msra.mxu0 0.0
    %946 = vmatprep.mubr.f32.mxu0 0.0
    %947 = vmatmul.mubr.f32.gmra.mxu0 %v789
    %v948 = vpop.f32.mrf.mxu0
    %v949 = vadd.f32 0.0, %v948
    %v950 = vpop.f32.mrf.mxu0
    %951 = vdwg.mxu0
    %v952 = vmul.f32 %v949, 0.0625
    %v953 = vadd.f32 %v952, 1e-07
    %v954 = vlog2.pop %v953
    %v955 = vmul.f32 %v954, 0.6931472
    %v956 = vmul.f32 %v952, %v955
    %v957 = vsel %vm866, %v956, 0.0
    %958 = vadd.xlane.f32.xlu0 %v957
    %v959 = vpop.xlane.xlu0 %958
    %v960 = vrot.slane %v959, 4
    %v961 = vadd.f32 %v959, %v960
    %v962 = vrot.slane %v961, 2
    %v963 = vadd.f32 %v961, %v962
    %v964 = vrot.slane %v963, 1
    %v965 = vadd.f32 %v963, %v964
    %s966 = vtos %v965
    %s967 = ssub.f32 0.0, %s966
    %v968 = vstv %s967
    %v969 = vmul.f32 %v968, 1.442695
    %v970 = vpow.pop %v969
    %s971 = vtos %v970
    %v972 = vsel %vm147, %v436, -1.0
    %973 = vmax.xlane.f32.xlu0 %v972
    %v974 = vpop.xlane.xlu0 %973
    %vm975 = vcmp.eq.f32.partialorder %v972, %v974
    %v976 = vsel %vm975, %v146, 128
    %v977 = vand.u32 %v976, 65535
    %v978 = vshra.s32 %v976, 16
    %v979 = vcvt.s32.f32 %v977
    %v980 = vcvt.s32.f32 %v978
    %981 = vmin.xlane.f32.xlu0 %v980
    %v982 = vpop.xlane.xlu0 %981
    %vm983 = vcmp.eq.f32.partialorder %v980, %v982
    %v984 = vsel %vm983, %v979, inf
    %985 = vmin.xlane.f32.xlu0 %v984
    %v986 = vpop.xlane.xlu0 %985
    %v987 = vcvt.f32.s32 %v986
    %v988 = vcvt.f32.s32 %v982
    %v989 = vshll.u32 %v988, 16
    %v990 = vadd.s32 %v989, %v987
    %v991 = vsel %vm147, %v700, -1.0
    %992 = vmax.xlane.f32.xlu0 %v991
    %v993 = vpop.xlane.xlu0 %992
    %vm994 = vcmp.eq.f32.partialorder %v991, %v993
    %v995 = vsel %vm994, %v146, 128
    %v996 = vand.u32 %v995, 65535
    %v997 = vshra.s32 %v995, 16
    %v998 = vcvt.s32.f32 %v996
    %v999 = vcvt.s32.f32 %v997
    %1000 = vmin.xlane.f32.xlu0 %v999
    %v1001 = vpop.xlane.xlu0 %1000
    %vm1002 = vcmp.eq.f32.partialorder %v999, %v1001
    %v1003 = vsel %vm1002, %v998, inf
    %1004 = vmin.xlane.f32.xlu0 %v1003
    %v1005 = vpop.xlane.xlu0 %1004
    %v1006 = vcvt.f32.s32 %v1005
    %v1007 = vcvt.f32.s32 %v1001
    %v1008 = vshll.u32 %v1007, 16
    %v1009 = vadd.s32 %v1008, %v1006
    %vm1010 = vcmp.eq.s32.totalorder %v767, %v1009
    %v1011 = vsel %vm1010, 1, 0
    %v1012 = vcvt.s32.f32 %v1011
    %vm1013 = vcmask 7168
    %v1014 = vsel %vm1013, %v1012, 0.0
    %1015 = vadd.xlane.f32.xlu0 %v1014
    %v1016 = vpop.xlane.xlu0 %1015
    %v1017 = vrot.slane %v1016, 4
    %v1018 = vadd.f32 %v1016, %v1017
    %v1019 = vrot.slane %v1018, 2
    %v1020 = vadd.f32 %v1018, %v1019
    %v1021 = vrot.slane %v1020, 1
    %v1022 = vadd.f32 %v1020, %v1021
    %s1023 = vtos %v1022
    %s1024 = smul.f32 %s1023, 0.125
    %vm1025 = vcmp.eq.s32.totalorder %v781, %v990
    %v1026 = vsel %vm1025, 1, 0
    %v1027 = vcvt.s32.f32 %v1026
    %v1028 = vsel %vm1013, %v1027, 0.0
    %1029 = vadd.xlane.f32.xlu0 %v1028
    %v1030 = vpop.xlane.xlu0 %1029
    %v1031 = vrot.slane %v1030, 4
    %v1032 = vadd.f32 %v1030, %v1031
    %v1033 = vrot.slane %v1032, 2
    %v1034 = vadd.f32 %v1032, %v1033
    %v1035 = vrot.slane %v1034, 1
    %v1036 = vadd.f32 %v1034, %v1035
    %s1037 = vtos %v1036
    %s1038 = smul.f32 %s1037, 0.125
    %s1039 = sadd.f32 %s1024, %s1038
    %s1040 = smul.f32 %s1039, 0.5
    %vm1041 = vcmp.eq.s32.totalorder %v146, 0
    %v1042 = vstv %s749
    %v1043 = vsel %vm1041, %v1042, 0.0
    %v1044 = vadd.f32 %v1043, 0.0
    %vm1045 = vcmp.eq.s32.totalorder %v146, 1
    %v1046 = vstv %s881
    %v1047 = vsel %vm1045, %v1046, 0.0
    %v1048 = vadd.f32 %v1044, %v1047
    %vm1049 = vcmp.eq.s32.totalorder %v146, 2
    %v1050 = vstv %s971
    %v1051 = vsel %vm1049, %v1050, 0.0
    %v1052 = vadd.f32 %v1048, %v1051
    %vm1053 = vcmp.eq.s32.totalorder %v146, 3
    %v1054 = vstv %s1040
    %v1055 = vsel %vm1053, %v1054, 0.0
    %v1056 = vadd.f32 %v1052, %v1055
    %vm1057 = vcmp.eq.s32.totalorder %v146, 4
    %v1058 = vstv %s1024
    %v1059 = vsel %vm1057, %v1058, 0.0
    %v1060 = vadd.f32 %v1056, %v1059
    %vm1061 = vcmp.eq.s32.totalorder %v146, 5
    %v1062 = vstv %s1038
    %v1063 = vsel %vm1061, %v1062, 0.0
    %v1064 = vadd.f32 %v1060, %v1063
    %vm1065 = vcmp.eq.s32.totalorder %v146, 6
    %v1066 = vsel %vm1065, 8.0, 0.0
    %v1067 = vadd.f32 %v1064, %v1066
    %vm1068 = vcmask 57344
    %1069 = vst.msk [vmem:[#allocation7] sm:$0x1] %vm1068, %v1067
    // Predicated region
    $region18: #{tpu_custom_call.1} parent=1 // pred_check
      _
    $region19: #{tpu_custom_call.1} parent=1 // pred_check_branch
      %1071 = sbr.rel (0) target = $region21
    $region20: #{tpu_custom_call.1} parent=1 // pred_region
      %s1073 = ssub.s32 16, 16
      %1074 = vsyncadd [#allocation4], %s1073
      %s1076 = sshll.u32 [#allocation7], 4
      %s1077 = int_to_ptr.vmem [resolvable:$true] %s1076
      %1079 = dma.vmem_to_hbm [thread:$0]  %s1077, 16, %s2, [#allocation4]
    $region21: #{tpu_custom_call.1} parent=1 // pred_fallthru
      _
    // Predicated region
    $region22: #{tpu_custom_call.1} parent=1 // pred_check
      _
    $region23: #{tpu_custom_call.1} parent=1 // pred_check_branch
      %1081 = sbr.rel (0) target = $region25
    $region24: #{tpu_custom_call.1} parent=1 // pred_region
      %1082 = dma.done [#allocation4], 16
    $region25: #{tpu_custom_call.1} parent=1 // pred_fallthru
      _
    %1083 = vsyncpa [#allocation3], 1
    %1084 = vsyncpa [#allocation6], 1
    %1085 = vsyncpa [#allocation4], 1

</llo_original>
